<compile_context>
chip_gen: v5e
topology: v5e:2x2
jax: 0.10.0
libtpu: 0.0.40
codegen_flags: <defaults>
</compile_context>

<pallas_src>
import functools
import math

import jax
import jax.numpy as jnp
from jax.experimental import pallas as pl
from jax.experimental.pallas import tpu as pltpu

QMAX = 255.0  # 2**8 - 1  (num_bits = 8, qmin = 0)


def _round_up(a: int, b: int) -> int:
    return (a + b - 1) // b * b


def _largest_dividing_tile(total: int, cap: int) -> int:
    """Largest multiple of 128 that divides `total` (a multiple of 128), <= cap."""
    best = 128
    t = 256
    while t <= min(cap, total):
        if total % t == 0:
            best = t
        t += 128
    return best


# ---------------------------------------------------------------------------
# Quantization helpers (tiny, run once per tensor in the wrapper).
# ---------------------------------------------------------------------------
def _qparams_from_minmax(min_val, max_val):
    """Pack [scale, 1/scale, zero_point, degenerate_flag] as a (4,) f32 array."""
    degenerate = (min_val == max_val)
    scale = jnp.where(degenerate, jnp.float32(1.0), (max_val - min_val) / QMAX)
    zero_point = 0.0 - jnp.round(min_val / scale)   # qmin == 0, no zp clamp
    inv_scale = 1.0 / scale
    return jnp.stack([scale, inv_scale, zero_point,
                      degenerate.astype(jnp.float32)]).astype(jnp.float32)


def _fake_quantize_ref(x):
    """Plain-JAX per-tensor fake quantization (mirrors FakeQuantize.forward)."""
    min_val = jnp.min(x)
    max_val = jnp.max(x)
    degenerate = (min_val == max_val)
    scale = jnp.where(degenerate, jnp.float32(1.0), (max_val - min_val) / QMAX)
    zero_point = 0.0 - jnp.round(min_val / scale)
    x_q = jnp.clip(jnp.round(x / scale + zero_point), 0.0, QMAX)
    x_dq = (x_q - zero_point) * scale
    return jnp.where(degenerate, x, x_dq)


def _prepare_weight(weight, n_pad: int, k_pad: int):
    """Hoisted weight fake-quant -> (bf16 codes^T padded, eff. scale, zp).

    Batch-invariant: for repeated calls with the same weight this should be
    cached by the caller instead of being recomputed per forward call.
    """
    w = weight.astype(jnp.float32)
    n, k = w.shape
    w_min = jnp.min(w)
    w_max = jnp.max(w)
    degenerate = (w_min == w_max)
    scale = jnp.where(degenerate, jnp.float32(1.0), (w_max - w_min) / QMAX)
    zero_point = jnp.where(degenerate, jnp.float32(0.0),
                           0.0 - jnp.round(w_min / scale))
    codes = jnp.where(degenerate, jnp.ones_like(w),
                      jnp.clip(jnp.round(w / scale + zero_point), 0.0, QMAX))
    # Degenerate (all-equal) weight: FakeQuantize returns it unchanged;
    # codes == 1 with scale_eff == w_min, zp == 0 reproduces that exactly.
    scale_eff = jnp.where(degenerate, w_min, scale)
    codes_t = jnp.pad(codes, ((0, n_pad - n), (0, k_pad - k))).T
    return codes_t.astype(jnp.bfloat16), scale_eff, zero_point


# ---------------------------------------------------------------------------
# Pass 1: tiled bf16 matmul accumulating into the resident output block,
#          epilogue adds zero-point row correction + bias and emits per-tile
#          min/max (masked only on edge tiles) for the global output FQ.
# ---------------------------------------------------------------------------
def _qlinear_matmul_kernel(xhi_ref, xlo_ref, c_ref, rc_ref, b_ref,
                           y_ref, tmin_ref, tmax_ref,
                           *, valid_m, valid_n, grid_m, grid_n, grid_k,
                           m_has_pad, n_has_pad):
    # program_id only at the kernel top level (never inside pl.when bodies).
    i = pl.program_id(0)
    j = pl.program_id(1)
    k = pl.program_id(2)

    @pl.when(k == 0)
    def _init():
        y_ref[...] = jnp.zeros_like(y_ref)

    # Two bf16 MXU passes (hi + lo halves of x*scale) against the bf16 weight
    # codes; f32 accumulation straight into the VMEM-resident output block.
    y_ref[...] += (
        jnp.dot(xhi_ref[...], c_ref[...], preferred_element_type=jnp.float32)
        + jnp.dot(xlo_ref[...], c_ref[...], preferred_element_type=jnp.float32))

    # Epilogue.  K must stay the innermost, "arbitrary" grid axis so the stats
    # blocks are written exactly once per (i, j) before write-back.
    @pl.when(k == grid_k - 1)
    def _epilogue():
        out = y_ref[...] + rc_ref[...] + b_ref[...]
        y_ref[...] = out
        tm, tn = out.shape

        def _write_stats(vals_min, vals_max):
            mn = jnp.min(jnp.min(vals_min, axis=1, keepdims=True),
                         axis=0, keepdims=True)
            mx = jnp.max(jnp.max(vals_max, axis=1, keepdims=True),
                         axis=0, keepdims=True)
            tmin_ref[...] = jnp.broadcast_to(mn, tmin_ref.shape)
            tmax_ref[...] = jnp.broadcast_to(mx, tmax_ref.shape)

        def _stats_plain():
            _write_stats(out, out)

        def _stats_masked():
            rows = jax.lax.broadcasted_iota(jnp.int32, (tm, tn), 0) + i * tm
            cols = jax.lax.broadcasted_iota(jnp.int32, (tm, tn), 1) + j * tn
            valid = (rows < valid_m) & (cols < valid_n)
            big = jnp.float32(jnp.inf)
            _write_stats(jnp.where(valid, out, big),
                         jnp.where(valid, out, -big))

        if not (m_has_pad or n_has_pad):      # static: no padding anywhere
            _stats_plain()
        else:                                 # runtime: mask only edge tiles
            conds = []
            if m_has_pad:
                conds.append(i == grid_m - 1)
            if n_has_pad:
                conds.append(j == grid_n - 1)
            edge = conds[0]
            for c in conds[1:]:
                edge = jnp.logical_or(edge, c)
            pl.when(edge)(_stats_masked)
            pl.when(jnp.logical_not(edge))(_stats_plain)


# ---------------------------------------------------------------------------
# Pass 2: elementwise global output fake-quant, in place over pass-1 output.
# ---------------------------------------------------------------------------
def _output_fq_kernel(oqp_ref, y_ref, o_ref):
    scale = oqp_ref[0]
    inv_scale = oqp_ref[1]
    zp = oqp_ref[2]
    degenerate = oqp_ref[3]
    x = y_ref[...]
    x_q = jnp.clip(jnp.round(x * inv_scale + zp), 0.0, QMAX)
    x_dq = (x_q - zp) * scale
    o_ref[...] = jnp.where(degenerate != 0.0, x, x_dq)


# ---------------------------------------------------------------------------
# Wrapper
# ---------------------------------------------------------------------------
@functools.partial(jax.jit, static_argnames=("tm_max", "tn_max", "tk_max"))
def quantized_linear(x, weight, bias, *, tm_max=256, tn_max=512, tk_max=1024):
    """x: (B, in_features), weight: (out, in), bias: (out,) or None -> (B, out)."""
    B, K = x.shape
    N, K2 = weight.shape
    assert K == K2
    f32 = jnp.float32

    # ---- tile / padding choices (minimize zero-pad work) -------------------
    tm = min(tm_max, _round_up(B, 8))
    m_pad = _round_up(B, tm)
    grid_m = m_pad // tm

    k_pad = _round_up(K, 128)
    tk = _largest_dividing_tile(k_pad, tk_max)
    grid_k = k_pad // tk

    n_pad = _round_up(N, 128)
    tn = _largest_dividing_tile(n_pad, tn_max)
    if grid_m * (n_pad // tn) < 2 and n_pad >= 256:
        # ensure >=2 parallel blocks so v7x megacore sharding engages
        tn = _largest_dividing_tile(n_pad, tn // 2)
    grid_n = n_pad // tn

    # ---- batch-invariant weight / bias prep (hoisted out of the kernel) ----
    codes_t, w_scale, w_zp = _prepare_weight(weight, n_pad, k_pad)

    if bias is None:
        bias_q = jnp.zeros((N,), f32)
    else:
        bias_q = _fake_quantize_ref(bias.astype(f32))
    b_p = jnp.pad(bias_q, (0, n_pad - N)).reshape(1, n_pad)

    # ---- activation prep: fold weight scale into x, split into hi/lo bf16 --
    xs = x.astype(f32) * w_scale
    xs_hi = xs.astype(jnp.bfloat16)
    xs_lo = (xs - xs_hi.astype(f32)).astype(jnp.bfloat16)
    xhi_p = jnp.pad(xs_hi, ((0, m_pad - B), (0, k_pad - K)))
    xlo_p = jnp.pad(xs_lo, ((0, m_pad - B), (0, k_pad - K)))
    # zero-point term:  x @ w_q.T = (x*scale) @ codes - zp * rowsum(x*scale)
    rc = (-w_zp) * jnp.sum(xs, axis=1, keepdims=True)
    rc_p = jnp.pad(rc, ((0, m_pad - B), (0, 0)))

    kernel = functools.partial(
        _qlinear_matmul_kernel,
        valid_m=B, valid_n=N,
        grid_m=grid_m, grid_n=grid_n, grid_k=grid_k,
        m_has_pad=(m_pad != B), n_has_pad=(n_pad != N))

    cost = pl.CostEstimate(
        flops=2 * 2 * m_pad * n_pad * k_pad,
        transcendentals=0,
        bytes_accessed=(2 * 2 * m_pad * k_pad + 2 * k_pad * n_pad
                        + 4 * m_pad * n_pad + 4 * n_pad + 4 * m_pad))

    y_pad, tile_min, tile_max = pl.pallas_call(
        kernel,
        out_shape=(
            jax.ShapeDtypeStruct((m_pad, n_pad), f32),            # pre-FQ out
            jax.ShapeDtypeStruct((8 * grid_m, 128 * grid_n), f32),  # tile min
            jax.ShapeDtypeStruct((8 * grid_m, 128 * grid_n), f32),  # tile max
        ),
        grid=(grid_m, grid_n, grid_k),
        in_specs=[
            pl.BlockSpec((tm, tk), lambda i, j, k: (i, k)),   # x*scale hi
            pl.BlockSpec((tm, tk), lambda i, j, k: (i, k)),   # x*scale lo
            pl.BlockSpec((tk, tn), lambda i, j, k: (k, j)),   # weight codes^T
            pl.BlockSpec((tm, 1), lambda i, j, k: (i, 0)),    # zp row corr.
            pl.BlockSpec((1, tn), lambda i, j, k: (0, j)),    # fq'd bias
        ],
        out_specs=(
            pl.BlockSpec((tm, tn), lambda i, j, k: (i, j)),
            pl.BlockSpec((8, 128), lambda i, j, k: (i, j)),
            pl.BlockSpec((8, 128), lambda i, j, k: (i, j)),
        ),
        compiler_params=pltpu.CompilerParams(
            dimension_semantics=("parallel", "parallel", "arbitrary")),
        cost_estimate=cost,
    )(xhi_p, xlo_p, codes_t, rc_p, b_p)

    # Global output quant params from the tiny per-tile stats buffers.
    o_qparams = _qparams_from_minmax(jnp.min(tile_min), jnp.max(tile_max))

    # Pass 2: large lane-dense row panels, writing in place over y_pad.
    tm2 = m_pad
    while tm2 * n_pad * 4 > (8 << 20) and tm2 % 16 == 0:
        tm2 //= 2

    out_pad = pl.pallas_call(
        _output_fq_kernel,
        out_shape=jax.ShapeDtypeStruct((m_pad, n_pad), f32),
        grid=(m_pad // tm2,),
        in_specs=[
            pl.BlockSpec(memory_space=pltpu.MemorySpace.SMEM),   # output qparams
            pl.BlockSpec((tm2, n_pad), lambda i: (i, 0)),
        ],
        out_specs=pl.BlockSpec((tm2, n_pad), lambda i: (i, 0)),
        input_output_aliases={1: 0},
        compiler_params=pltpu.CompilerParams(
            dimension_semantics=("parallel",)),
    )(o_qparams, y_pad)

    # NOTE: padded rows/cols of y_pad/out_pad hold garbage (bias / zp terms);
    # they are masked out of the min/max above and sliced off here.
    return out_pad[:B, :N]


# ---------------------------------------------------------------------------
# Plain-JAX reference of the same forward pass (for the self-check).
# ---------------------------------------------------------------------------
def _reference(x, weight, bias):
    w_q = _fake_quantize_ref(weight)
    out = jax.lax.dot_general(
        x, w_q, dimension_numbers=(((1,), (1,)), ((), ())),
        precision=jax.lax.Precision.HIGHEST,
        preferred_element_type=jnp.float32)
    out = out + _fake_quantize_ref(bias)
    return _fake_quantize_ref(out)


if __name__ == "__main__":
    key = jax.random.PRNGKey(0)
    k_x, k_w, k_b = jax.random.split(key, 3)

    # Small but non-trivial: row padding (12 -> 16), column padding / two
    # 128-wide N blocks (160 -> 256), and a K of 384 (single 384-wide K tile
    # with default caps; three 128-wide K tiles in the second run below).
    B, in_features, out_features = 12, 384, 160

    # nn.Linear-style init: kaiming_uniform_(a=sqrt(5)) => U(-1/sqrt(fan_in), .)
    bound = 1.0 / math.sqrt(in_features)
    weight = jax.random.uniform(k_w, (out_features, in_features), jnp.float32,
                                -bound, bound)
    bias = jax.random.uniform(k_b, (out_features,), jnp.float32, -bound, bound)
    x = jax.random.normal(k_x, (B, in_features), jnp.float32)

    ref = jax.block_until_ready(_reference(x, weight, bias))
    qstep = float((jnp.max(ref) - jnp.min(ref)) / QMAX)

    def check(out):
        assert out.shape == (B, out_features)
        max_err = float(jnp.max(jnp.abs(out - ref)))
        mean_err = float(jnp.mean(jnp.abs(out - ref)))
        # Small float slack plus (at most) a couple of 8-bit output-quant
        # steps: bf16 hi/lo split and MXU-vs-XLA accumulation order can flip
        # an element across a quantization-bucket boundary (1-LSB effect).
        assert max_err <= 2.0 * qstep + 1e-3, f"max_err={max_err} qstep={qstep}"
        assert mean_err <= 0.25 * qstep + 1e-4, f"mean_err={mean_err} qstep={qstep}"

    # Default (large-tile) configuration: single K step, 2 parallel N blocks.
    check(jax.block_until_ready(quantized_linear(x, weight, bias)))
    # Forced K/N tiling: exercises multi-step accumulation into the resident
    # output block and the edge-tile min/max masking.
    check(jax.block_until_ready(
        quantized_linear(x, weight, bias, tk_max=128, tn_max=128)))

    print("KERNEL_OK")
</pallas_src>

<mosaic_0001>
module attributes {stable_mosaic.version = 11 : i64} {
  func.func @_qlinear_matmul_kernel(%arg0: i32, %arg1: i32, %arg2: i32, %arg3: memref<16x384xbf16, #tpu.memory_space<vmem>>, %arg4: memref<16x384xbf16, #tpu.memory_space<vmem>>, %arg5: memref<384x128xbf16, #tpu.memory_space<vmem>>, %arg6: memref<16x1xf32, #tpu.memory_space<vmem>>, %arg7: memref<1x128xf32, #tpu.memory_space<vmem>>, %arg8: memref<16x128xf32, #tpu.memory_space<vmem>>, %arg9: memref<8x128xf32, #tpu.memory_space<vmem>>, %arg10: memref<8x128xf32, #tpu.memory_space<vmem>>) attributes {dimension_semantics = [#tpu.dimension_semantics<parallel>, #tpu.dimension_semantics<parallel>, #tpu.dimension_semantics<arbitrary>], iteration_bounds = array<i64: 1, 2, 1>, scalar_prefetch = 0 : i64, scratch_operands = 0 : i64, tpu.core_type = #tpu.core_type<tc>, window_params = [{transform_indices = @transform_0, window_bounds = array<i64: 16, 384>}, {transform_indices = @transform_1, window_bounds = array<i64: 16, 384>}, {transform_indices = @transform_2, window_bounds = array<i64: 384, 128>}, {transform_indices = @transform_3, window_bounds = array<i64: 16, 1>}, {transform_indices = @transform_4, window_bounds = array<i64: 1, 128>}, {transform_indices = @transform_5, window_bounds = array<i64: 16, 128>}, {transform_indices = @transform_6, window_bounds = array<i64: 8, 128>}, {transform_indices = @transform_7, window_bounds = array<i64: 8, 128>}]} {
    %c0_i32 = arith.constant 0 : i32
    %0 = arith.cmpi eq, %arg2, %c0_i32 : i32
    %1 = arith.extui %0 : i1 to i32
    %c0_i32_0 = arith.constant 0 : i32
    %2 = arith.cmpi ne, %1, %c0_i32_0 : i32
    scf.if %2 {
      %cst_15 = arith.constant 0.000000e+00 : f32
      %16 = vector.broadcast %cst_15 : f32 to vector<16x128xf32>
      %c0_16 = arith.constant 0 : index
      %c0_17 = arith.constant 0 : index
      %17 = vector.load %arg8[%c0_16, %c0_17] : memref<16x128xf32, #tpu.memory_space<vmem>>, vector<16x128xf32>
      tpu.vector_store %arg8[%c0_16, %c0_17], %16 {strides = array<i32>} : memref<16x128xf32, #tpu.memory_space<vmem>>, vector<16x128xf32>,
    } else {
    }
    %c0 = arith.constant 0 : index
    %c0_1 = arith.constant 0 : index
    %3 = vector.load %arg8[%c0, %c0_1] : memref<16x128xf32, #tpu.memory_space<vmem>>, vector<16x128xf32>
    %c0_2 = arith.constant 0 : index
    %c0_3 = arith.constant 0 : index
    %4 = vector.load %arg3[%c0_2, %c0_3] : memref<16x384xbf16, #tpu.memory_space<vmem>>, vector<16x384xbf16>
    %c0_4 = arith.constant 0 : index
    %c0_5 = arith.constant 0 : index
    %5 = vector.load %arg5[%c0_4, %c0_5] : memref<384x128xbf16, #tpu.memory_space<vmem>>, vector<384x128xbf16>
    %cst = arith.constant dense<0.000000e+00> : vector<16x128xf32>
    %6 = tpu.matmul %4, %5, %cst {dimension_numbers = #tpu.dot_dimension_numbers<[1], [0], [0], [1], [0, 0, 1, 1], [], []>} : vector<16x384xbf16>, vector<384x128xbf16>, vector<16x128xf32> -> vector<16x128xf32>
    %c0_6 = arith.constant 0 : index
    %c0_7 = arith.constant 0 : index
    %7 = vector.load %arg4[%c0_6, %c0_7] : memref<16x384xbf16, #tpu.memory_space<vmem>>, vector<16x384xbf16>
    %c0_8 = arith.constant 0 : index
    %c0_9 = arith.constant 0 : index
    %8 = vector.load %arg5[%c0_8, %c0_9] : memref<384x128xbf16, #tpu.memory_space<vmem>>, vector<384x128xbf16>
    %cst_10 = arith.constant dense<0.000000e+00> : vector<16x128xf32>
    %9 = tpu.matmul %7, %8, %cst_10 {dimension_numbers = #tpu.dot_dimension_numbers<[1], [0], [0], [1], [0, 0, 1, 1], [], []>} : vector<16x384xbf16>, vector<384x128xbf16>, vector<16x128xf32> -> vector<16x128xf32>
    %10 = arith.addf %6, %9 : vector<16x128xf32>
    %11 = arith.addf %3, %10 : vector<16x128xf32>
    %c0_11 = arith.constant 0 : index
    %c0_12 = arith.constant 0 : index
    %12 = vector.load %arg8[%c0_11, %c0_12] : memref<16x128xf32, #tpu.memory_space<vmem>>, vector<16x128xf32>
    tpu.vector_store %arg8[%c0_11, %c0_12], %11 {strides = array<i32>} : memref<16x128xf32, #tpu.memory_space<vmem>>, vector<16x128xf32>,
    %c0_i32_13 = arith.constant 0 : i32
    %13 = arith.cmpi eq, %arg2, %c0_i32_13 : i32
    %14 = arith.extui %13 : i1 to i32
    %c0_i32_14 = arith.constant 0 : i32
    %15 = arith.cmpi ne, %14, %c0_i32_14 : i32
    scf.if %15 {
      %c0_15 = arith.constant 0 : index
      %c0_16 = arith.constant 0 : index
      %16 = vector.load %arg8[%c0_15, %c0_16] : memref<16x128xf32, #tpu.memory_space<vmem>>, vector<16x128xf32>
      %c0_17 = arith.constant 0 : index
      %c0_18 = arith.constant 0 : index
      %17 = vector.load %arg6[%c0_17, %c0_18] : memref<16x1xf32, #tpu.memory_space<vmem>>, vector<16x1xf32>
      %18 = vector.broadcast %17 : vector<16x1xf32> to vector<16x128xf32>
      %19 = arith.addf %16, %18 : vector<16x128xf32>
      %c0_19 = arith.constant 0 : index
      %c0_20 = arith.constant 0 : index
      %20 = vector.load %arg7[%c0_19, %c0_20] : memref<1x128xf32, #tpu.memory_space<vmem>>, vector<1x128xf32>
      %21 = vector.broadcast %20 : vector<1x128xf32> to vector<16x128xf32>
      %22 = arith.addf %19, %21 : vector<16x128xf32>
      %c0_21 = arith.constant 0 : index
      %c0_22 = arith.constant 0 : index
      %23 = vector.load %arg8[%c0_21, %c0_22] : memref<16x128xf32, #tpu.memory_space<vmem>>, vector<16x128xf32>
      tpu.vector_store %arg8[%c0_21, %c0_22], %22 {strides = array<i32>} : memref<16x128xf32, #tpu.memory_space<vmem>>, vector<16x128xf32>,
      %c0_i32_23 = arith.constant 0 : i32
      %24 = arith.cmpi eq, %arg0, %c0_i32_23 : i32
      %c1_i32 = arith.constant 1 : i32
      %25 = arith.cmpi eq, %arg1, %c1_i32 : i32
      %26 = arith.ori %24, %25 : i1
      %27 = arith.extui %26 : i1 to i32
      %c0_i32_24 = arith.constant 0 : i32
      %28 = arith.cmpi ne, %27, %c0_i32_24 : i32
      scf.if %28 {
        %32 = tpu.iota {dimensions = array<i32: 0>} : vector<16x128xi32>
        %c16_i32 = arith.constant 16 : i32
        %33 = arith.muli %arg0, %c16_i32 : i32
        %34 = vector.broadcast %33 : i32 to vector<16x128xi32>
        %35 = arith.addi %32, %34 : vector<16x128xi32>
        %36 = tpu.iota {dimensions = array<i32: 1>} : vector<16x128xi32>
        %c128_i32 = arith.constant 128 : i32
        %37 = arith.muli %arg1, %c128_i32 : i32
        %38 = vector.broadcast %37 : i32 to vector<16x128xi32>
        %39 = arith.addi %36, %38 : vector<16x128xi32>
        %c12_i32 = arith.constant 12 : i32
        %40 = vector.broadcast %c12_i32 : i32 to vector<16x128xi32>
        %41 = arith.cmpi slt, %35, %40 : vector<16x128xi32>
        %c160_i32 = arith.constant 160 : i32
        %42 = vector.broadcast %c160_i32 : i32 to vector<16x128xi32>
        %43 = arith.cmpi slt, %39, %42 : vector<16x128xi32>
        %44 = arith.andi %41, %43 : vector<16x128xi1>
        %cst_26 = arith.constant 0x7F800000 : f32
        %45 = vector.broadcast %cst_26 : f32 to vector<16x128xf32>
        %46 = arith.select %44, %22, %45 : vector<16x128xi1>, vector<16x128xf32>
        %cst_27 = arith.constant 0.000000e+00 : f32
        %cst_28 = arith.constant 0x7F800000 : f32
        %47 = arith.subf %cst_27, %cst_28 : f32
        %48 = vector.broadcast %47 : f32 to vector<16x128xf32>
        %49 = arith.select %44, %22, %48 : vector<16x128xi1>, vector<16x128xf32>
        %cst_29 = arith.constant dense<0x7F800000> : vector<16xf32>
        %50 = vector.multi_reduction <minimumf>, %46, %cst_29 [1] : vector<16x128xf32> to vector<16xf32>
        %51 = vector.shape_cast %50 : vector<16xf32> to vector<16x1xf32>
        %cst_30 = arith.constant dense<0x7F800000> : vector<1xf32>
        %52 = vector.multi_reduction <minimumf>, %51, %cst_30 [0] : vector<16x1xf32> to vector<1xf32>
        %53 = vector.shape_cast %52 : vector<1xf32> to vector<1x1xf32>
        %cst_31 = arith.constant dense<0xFF800000> : vector<16xf32>
        %54 = vector.multi_reduction <maximumf>, %49, %cst_31 [1] : vector<16x128xf32> to vector<16xf32>
        %55 = vector.shape_cast %54 : vector<16xf32> to vector<16x1xf32>
        %cst_32 = arith.constant dense<0xFF800000> : vector<1xf32>
        %56 = vector.multi_reduction <maximumf>, %55, %cst_32 [0] : vector<16x1xf32> to vector<1xf32>
        %57 = vector.shape_cast %56 : vector<1xf32> to vector<1x1xf32>
        %58 = vector.shape_cast %53 : vector<1x1xf32> to vector<1x1xf32>
        %59 = vector.broadcast %58 : vector<1x1xf32> to vector<8x128xf32>
        %c0_33 = arith.constant 0 : index
        %c0_34 = arith.constant 0 : index
        %60 = vector.load %arg9[%c0_33, %c0_34] : memref<8x128xf32, #tpu.memory_space<vmem>>, vector<8x128xf32>
        tpu.vector_store %arg9[%c0_33, %c0_34], %59 {strides = array<i32>} : memref<8x128xf32, #tpu.memory_space<vmem>>, vector<8x128xf32>,
        %61 = vector.shape_cast %57 : vector<1x1xf32> to vector<1x1xf32>
        %62 = vector.broadcast %61 : vector<1x1xf32> to vector<8x128xf32>
        %c0_35 = arith.constant 0 : index
        %c0_36 = arith.constant 0 : index
        %63 = vector.load %arg10[%c0_35, %c0_36] : memref<8x128xf32, #tpu.memory_space<vmem>>, vector<8x128xf32>
        tpu.vector_store %arg10[%c0_35, %c0_36], %62 {strides = array<i32>} : memref<8x128xf32, #tpu.memory_space<vmem>>, vector<8x128xf32>,
      } else {
      }
      %true = arith.constant true
      %29 = arith.xori %26, %true : i1
      %30 = arith.extui %29 : i1 to i32
      %c0_i32_25 = arith.constant 0 : i32
      %31 = arith.cmpi ne, %30, %c0_i32_25 : i32
      scf.if %31 {
        %cst_26 = arith.constant dense<0x7F800000> : vector<16xf32>
        %32 = vector.multi_reduction <minimumf>, %22, %cst_26 [1] : vector<16x128xf32> to vector<16xf32>
        %33 = vector.shape_cast %32 : vector<16xf32> to vector<16x1xf32>
        %cst_27 = arith.constant dense<0x7F800000> : vector<1xf32>
        %34 = vector.multi_reduction <minimumf>, %33, %cst_27 [0] : vector<16x1xf32> to vector<1xf32>
        %35 = vector.shape_cast %34 : vector<1xf32> to vector<1x1xf32>
        %cst_28 = arith.constant dense<0xFF800000> : vector<16xf32>
        %36 = vector.multi_reduction <maximumf>, %22, %cst_28 [1] : vector<16x128xf32> to vector<16xf32>
        %37 = vector.shape_cast %36 : vector<16xf32> to vector<16x1xf32>
        %cst_29 = arith.constant dense<0xFF800000> : vector<1xf32>
        %38 = vector.multi_reduction <maximumf>, %37, %cst_29 [0] : vector<16x1xf32> to vector<1xf32>
        %39 = vector.shape_cast %38 : vector<1xf32> to vector<1x1xf32>
        %40 = vector.shape_cast %35 : vector<1x1xf32> to vector<1x1xf32>
        %41 = vector.broadcast %40 : vector<1x1xf32> to vector<8x128xf32>
        %c0_30 = arith.constant 0 : index
        %c0_31 = arith.constant 0 : index
        %42 = vector.load %arg9[%c0_30, %c0_31] : memref<8x128xf32, #tpu.memory_space<vmem>>, vector<8x128xf32>
        tpu.vector_store %arg9[%c0_30, %c0_31], %41 {strides = array<i32>} : memref<8x128xf32, #tpu.memory_space<vmem>>, vector<8x128xf32>,
        %43 = vector.shape_cast %39 : vector<1x1xf32> to vector<1x1xf32>
        %44 = vector.broadcast %43 : vector<1x1xf32> to vector<8x128xf32>
        %c0_32 = arith.constant 0 : index
        %c0_33 = arith.constant 0 : index
        %45 = vector.load %arg10[%c0_32, %c0_33] : memref<8x128xf32, #tpu.memory_space<vmem>>, vector<8x128xf32>
        tpu.vector_store %arg10[%c0_32, %c0_33], %44 {strides = array<i32>} : memref<8x128xf32, #tpu.memory_space<vmem>>, vector<8x128xf32>,
      } else {
      }
    } else {
    }
    return
  }
  func.func @transform_0(%arg0: i32, %arg1: i32, %arg2: i32) -> (i32, i32) {
    %c0_i32 = arith.constant 0 : i32
    return %arg0, %arg2 : i32, i32
  }
  func.func @transform_1(%arg0: i32, %arg1: i32, %arg2: i32) -> (i32, i32) {
    %c0_i32 = arith.constant 0 : i32
    return %arg0, %arg2 : i32, i32
  }
  func.func @transform_2(%arg0: i32, %arg1: i32, %arg2: i32) -> (i32, i32) {
    %c0_i32 = arith.constant 0 : i32
    return %arg2, %arg1 : i32, i32
  }
  func.func @transform_3(%arg0: i32, %arg1: i32, %arg2: i32) -> (i32, i32) {
    %c0_i32 = arith.constant 0 : i32
    %c0_i32_0 = arith.constant 0 : i32
    return %arg0, %c0_i32 : i32, i32
  }
  func.func @transform_4(%arg0: i32, %arg1: i32, %arg2: i32) -> (i32, i32) {
    %c0_i32 = arith.constant 0 : i32
    %c0_i32_0 = arith.constant 0 : i32
    return %c0_i32, %arg1 : i32, i32
  }
  func.func @transform_5(%arg0: i32, %arg1: i32, %arg2: i32) -> (i32, i32) {
    %c0_i32 = arith.constant 0 : i32
    return %arg0, %arg1 : i32, i32
  }
  func.func @transform_6(%arg0: i32, %arg1: i32, %arg2: i32) -> (i32, i32) {
    %c0_i32 = arith.constant 0 : i32
    return %arg0, %arg1 : i32, i32
  }
  func.func @transform_7(%arg0: i32, %arg1: i32, %arg2: i32) -> (i32, i32) {
    %c0_i32 = arith.constant 0 : i32
    return %arg0, %arg1 : i32, i32
  }
}

module attributes {stable_mosaic.version = 11 : i64} {
  func.func @_output_fq_kernel(%arg0: i32, %arg1: memref<4xf32, #tpu.memory_space<smem>>, %arg2: memref<16x256xf32, #tpu.memory_space<vmem>>, %arg3: memref<16x256xf32, #tpu.memory_space<vmem>>) attributes {dimension_semantics = [#tpu.dimension_semantics<parallel>], iteration_bounds = array<i64: 1>, scalar_prefetch = 0 : i64, scratch_operands = 0 : i64, tpu.core_type = #tpu.core_type<tc>, window_params = [{transform_indices = @transform_0, window_bounds = array<i64: 4>}, {transform_indices = @transform_1, window_bounds = array<i64: 16, 256>}, {transform_indices = @transform_2, window_bounds = array<i64: 16, 256>}]} {
    %c0 = arith.constant 0 : index
    %0 = memref.load %arg1[%c0] : memref<4xf32, #tpu.memory_space<smem>>
    %c1 = arith.constant 1 : index
    %1 = memref.load %arg1[%c1] : memref<4xf32, #tpu.memory_space<smem>>
    %c2 = arith.constant 2 : index
    %2 = memref.load %arg1[%c2] : memref<4xf32, #tpu.memory_space<smem>>
    %c3 = arith.constant 3 : index
    %3 = memref.load %arg1[%c3] : memref<4xf32, #tpu.memory_space<smem>>
    %c0_0 = arith.constant 0 : index
    %c0_1 = arith.constant 0 : index
    %4 = vector.load %arg2[%c0_0, %c0_1] : memref<16x256xf32, #tpu.memory_space<vmem>>, vector<16x256xf32>
    %5 = vector.broadcast %1 : f32 to vector<16x256xf32>
    %6 = arith.mulf %4, %5 : vector<16x256xf32>
    %7 = vector.broadcast %2 : f32 to vector<16x256xf32>
    %8 = arith.addf %6, %7 : vector<16x256xf32>
    %9 = math.roundeven %8 : vector<16x256xf32>
    %cst = arith.constant 0.000000e+00 : f32
    %cst_2 = arith.constant 2.550000e+02 : f32
    %10 = vector.broadcast %cst : f32 to vector<16x256xf32>
    %11 = arith.maximumf %10, %9 : vector<16x256xf32>
    %12 = vector.broadcast %cst_2 : f32 to vector<16x256xf32>
    %13 = arith.minimumf %12, %11 : vector<16x256xf32>
    %14 = vector.broadcast %2 : f32 to vector<16x256xf32>
    %15 = arith.subf %13, %14 : vector<16x256xf32>
    %16 = vector.broadcast %0 : f32 to vector<16x256xf32>
    %17 = arith.mulf %15, %16 : vector<16x256xf32>
    %cst_3 = arith.constant 0.000000e+00 : f32
    %18 = arith.cmpf one, %3, %cst_3 : f32
    %19 = arith.select %18, %4, %17 : vector<16x256xf32>
    %c0_4 = arith.constant 0 : index
    %c0_5 = arith.constant 0 : index
    %20 = vector.load %arg3[%c0_4, %c0_5] : memref<16x256xf32, #tpu.memory_space<vmem>>, vector<16x256xf32>
    tpu.vector_store %arg3[%c0_4, %c0_5], %19 {strides = array<i32>} : memref<16x256xf32, #tpu.memory_space<vmem>>, vector<16x256xf32>,
    return
  }
  func.func @transform_0(%arg0: i32) -> i32 {
    %c0_i32 = arith.constant 0 : i32
    %c0_i32_0 = arith.constant 0 : i32
    return %c0_i32 : i32
  }
  func.func @transform_1(%arg0: i32) -> (i32, i32) {
    %c0_i32 = arith.constant 0 : i32
    %c0_i32_0 = arith.constant 0 : i32
    return %arg0, %c0_i32 : i32, i32
  }
  func.func @transform_2(%arg0: i32) -> (i32, i32) {
    %c0_i32 = arith.constant 0 : i32
    %c0_i32_0 = arith.constant 0 : i32
    return %arg0, %c0_i32 : i32, i32
  }
}

</mosaic_0001>

<llo_original>
// kernel: quantized_linear.3
$region0: #{quantized_linear.3}
  #allocation0 [shape = 'u32[]', space=smem, size = 0x4, offset = 0x4, fixed_abs, tag = 'smem constant byte address 0x4 - core index']
  #allocation1 [shape = 'u32[72,128]{1,0:T(1,128)}', space=vmem, size = 0x9000, scoped, tag = 'internal scratch']
  %s0 = inlined_call_operand.vmem [shape: f32[4], index: 0, kind: input, shape index: {}]
  %s1 = inlined_call_operand.vmem [shape: f32[16,256], index: 1, kind: input, shape index: {}, may-alias: {1,2}]
  %s2 = inlined_call_operand.vmem [shape: f32[16,256], index: 2, kind: output, shape index: {}, may-alias: {1,2}]
  %s3 = sld [smem:[#allocation0]]
  $region22: #{quantized_linear.3} parent=0
    _
  %s5 = ssub.s32 1, %s3
  %s6 = scalar_select 0, %s5, %s3
  $region1: #{quantized_linear.3} parent=0
    #allocation2 [shape = 'u8[512]{0}', space=smem, size = 0x200, scoped, tag = 'input window, operand 0, single buffered']
    #allocation3 [shape = 's32[1]{0}', space=sflag, size = 0x4, scoped, tag = 'scoped memory for quantized_linear.3']
    %7 = vsyncpa [#allocation3], 0
    // Predicated region
    $region2: #{quantized_linear.3} parent=1 // pred_check
      _
    $region3: #{quantized_linear.3} parent=1 // pred_check_branch
      %9 = sbr.rel (0) target = $region5
    $region4: #{quantized_linear.3} parent=1 // pred_region
      %11 = vsyncadd [#allocation3], 0
      %s13 = sshll.u32 %s0, 4
      %s14 = int_to_ptr.vmem [resolvable:$true] %s13
      %16 = dma.vmem_to_smem %s14, 16, [#allocation2], [#allocation3]
    $region5: #{quantized_linear.3} parent=1 // pred_fallthru
      _
    // Predicated region
    $region6: #{quantized_linear.3} parent=1 // pred_check
      _
    $region7: #{quantized_linear.3} parent=1 // pred_check_branch
      %18 = sbr.rel (0) target = $region9
    $region8: #{quantized_linear.3} parent=1 // pred_region
      _
    $region9: #{quantized_linear.3} parent=1 // pred_fallthru
      _
    // Predicated region
    $region10: #{quantized_linear.3} parent=1 // pred_check
      _
    $region11: #{quantized_linear.3} parent=1 // pred_check_branch
      %20 = sbr.rel (0) target = $region13
    $region12: #{quantized_linear.3} parent=1 // pred_region
      %22 = dma.done [#allocation3], 16
    $region13: #{quantized_linear.3} parent=1 // pred_fallthru
      _
    %23 = sfence
    %s24 = sld [smem:[#allocation2]]
    %s25 = sld [smem:[#allocation2 + $0x1]]
    %s26 = sld [smem:[#allocation2 + $0x2]]
    %s27 = sld [smem:[#allocation2 + $0x3]]
    %v28 = vld [vmem:[%s1] sm:$0xff]
    %v29 = vld [vmem:[%s1 + $0x8] sm:$0xff]
    %v30 = vld [vmem:[%s1 + $0x10] sm:$0xff]
    %v31 = vld [vmem:[%s1 + $0x18] sm:$0xff]
    %v32 = vstv %s25
    %v33 = vmul.f32 %v28, %v32
    %v34 = vmul.f32 %v29, %v32
    %v35 = vmul.f32 %v30, %v32
    %v36 = vmul.f32 %v31, %v32
    %v37 = vstv %s26
    %v38 = vadd.f32 %v33, %v37
    %v39 = vadd.f32 %v34, %v37
    %v40 = vadd.f32 %v35, %v37
    %v41 = vadd.f32 %v36, %v37
    %v42 = vround.ne.pseudo %v38
    %v43 = vround.ne.pseudo %v39
    %v44 = vround.ne.pseudo %v40
    %v45 = vround.ne.pseudo %v41
    %v46 = vmax.f32 %v42, 0.0
    %v47 = vmax.f32 %v43, 0.0
    %v48 = vmax.f32 %v44, 0.0
    %v49 = vmax.f32 %v45, 0.0
    %v50 = vmin.f32 %v46, 255.0
    %v51 = vmin.f32 %v47, 255.0
    %v52 = vmin.f32 %v48, 255.0
    %v53 = vmin.f32 %v49, 255.0
    %v54 = vsub.f32 %v50, %v37
    %v55 = vsub.f32 %v51, %v37
    %v56 = vsub.f32 %v52, %v37
    %v57 = vsub.f32 %v53, %v37
    %v58 = vstv %s24
    %v59 = vmul.f32 %v54, %v58
    %v60 = vmul.f32 %v55, %v58
    %v61 = vmul.f32 %v56, %v58
    %v62 = vmul.f32 %v57, %v58
    %p63 = scmp.ne.f32.partialorder %s27, 0.0
    %s64 = scalar_select %p63, 1, 0
    %v65 = vstv %s64
    %vm66 = vcmp.eq.s32.totalorder %v65, 1
    %v67 = vsel %vm66, %v28, %v59
    %v68 = vsel %vm66, %v29, %v60
    %v69 = vsel %vm66, %v30, %v61
    %v70 = vsel %vm66, %v31, %v62
    %71 = vst [vmem:[%s2] sm:$0xff] %v67
    %72 = vst [vmem:[%s2 + $0x8] sm:$0xff] %v68
    %73 = vst [vmem:[%s2 + $0x10] sm:$0xff] %v69
    %74 = vst [vmem:[%s2 + $0x18] sm:$0xff] %v70
    // Predicated region
    $region14: #{quantized_linear.3} parent=1 // pred_check
      _
    $region15: #{quantized_linear.3} parent=1 // pred_check_branch
      %76 = sbr.rel (0) target = $region17
    $region16: #{quantized_linear.3} parent=1 // pred_region
      _
    $region17: #{quantized_linear.3} parent=1 // pred_fallthru
      _
    // Predicated region
    $region18: #{quantized_linear.3} parent=1 // pred_check
      _
    $region19: #{quantized_linear.3} parent=1 // pred_check_branch
      %78 = sbr.rel (0) target = $region21
    $region20: #{quantized_linear.3} parent=1 // pred_region
      _
    $region21: #{quantized_linear.3} parent=1 // pred_fallthru
      _
    %79 = vsyncpa [#allocation3], 1

// kernel: quantized_linear.2
$region0: #{quantized_linear.2}
  #allocation0 [shape = 'u32[]', space=smem, size = 0x4, offset = 0x4, fixed_abs, tag = 'smem constant byte address 0x4 - core index']
  #allocation1 [shape = 'u32[72,128]{1,0:T(1,128)}', space=vmem, size = 0x9000, scoped, tag = 'internal scratch']
  %s0 = inlined_call_operand.vmem [shape: bf16[16,384], index: 0, kind: input, shape index: {}]
  %s1 = inlined_call_operand.vmem [shape: bf16[16,384], index: 1, kind: input, shape index: {}]
  %s2 = inlined_call_operand.vmem [shape: bf16[384,256], index: 2, kind: input, shape index: {}]
  %s3 = inlined_call_operand.vmem [shape: f32[16,1], index: 3, kind: input, shape index: {}]
  %s4 = inlined_call_operand.vmem [shape: f32[1,256], index: 4, kind: input, shape index: {}]
  %s5 = inlined_call_operand.vmem [shape: f32[16,256], index: 5, kind: output, shape index: {0}]
  %s6 = inlined_call_operand.vmem [shape: f32[8,256], index: 6, kind: output, shape index: {1}]
  %s7 = inlined_call_operand.vmem [shape: f32[8,256], index: 7, kind: output, shape index: {2}]
  %8 = xla_tuple %s5, %s6, %s7
  %s9 = sld [smem:[#allocation0]]
  $region160: #{quantized_linear.2} parent=0
    _
  %s11 = ssub.s32 1, %s9
  %s12 = scalar_select 0, %s11, %s9
  $region1: #{quantized_linear.2} parent=0
    #allocation2 [shape = 'u8[196608]{0}', space=vmem, size = 0x30000, scoped, tag = 'input window, operand 2']
    #allocation3 [shape = 'u8[16384]{0}', space=vmem, size = 0x4000, scoped, tag = 'output window, operand 0']
    loop: start=0, step=1, limit=4
    $region2: #{quantized_linear.2} parent=1 // loop_pre_header
      _
    $region3: #{quantized_linear.2} parent=1 // loop_header
      %s14 = sphi 0, %s18
      %p15 = scmp.ge.s32.totalorder %s14, 4
      %s21 = sphi 0, %s40
      %s22 = sphi 0, %s36
      %s23 = sphi 0, %s32
      %s24 = sphi 0, %s21
      %s25 = sphi 0, %s22
      %s26 = sphi 0, %s23
      %s27 = sphi 0, %s24
      %s28 = sphi 0, %s25
      %s29 = sphi 0, %s26
      %s45 = sphi 0, %s47
      %s48 = sphi 0, %s45
      %s49 = sphi 0, %s48
      %s65 = sphi 0, %s49
      %s73 = sphi 0, %s75
      %s76 = sphi 0, %s73
      %s77 = sphi 0, %s76
      %s93 = sphi 0, %s77
      %s101 = sphi 0, %s103
      %s104 = sphi 0, %s101
      %s105 = sphi 0, %s104
      %s121 = sphi 0, %s105
      %s127 = sphi 0, %s129
      %s130 = sphi 0, %s127
      %s131 = sphi 0, %s130
      %s147 = sphi 0, %s131
      %s153 = sphi 0, %s155
      %s156 = sphi 0, %s153
      %s157 = sphi 0, %s156
      %s173 = sphi 0, %s157
      %s181 = sphi 0, %s183
      %s184 = sphi 0, %s181
      %s185 = sphi 0, %s184
      %s201 = sphi 0, %s185
      %s209 = sphi 0, %s211
      %s212 = sphi 0, %s209
      %s213 = sphi 0, %s212
      %s229 = sphi 0, %s213
      %s237 = sphi 0, %s239
      %s240 = sphi 0, %s237
      %s241 = sphi 0, %s240
      %s257 = sphi 0, %s241
    $region4: #{quantized_linear.2} parent=1 // loop_header_branch
      %17 = sbr.rel (%p15) target = $region8
    $region5: #{quantized_linear.2} parent=1 // loop_body
      %s19 = ssub.s32 %s14, 1
      %s20 = ssub.s32 %s14, 2
      %s30 = sadd.s32 1, %s23
      %p31 = scmp.ge.s32.totalorder %s30, 1
      %s32 = scalar_select %p31, 0, %s30
      %s33 = sadd.s32 1, %s22
      %s34 = scalar_select %p31, %s33, %s22
      %p35 = scmp.ge.s32.totalorder %s34, 2
      %s36 = scalar_select %p35, 0, %s34
      %s37 = sadd.s32 1, %s21
      %s38 = scalar_select %p35, %s37, %s21
      %p39 = scmp.ge.s32.totalorder %s38, 1
      %s40 = scalar_select %p39, 0, %s38
      %s41 = ssub.s32 %s21, %s40
      %s42 = ssub.s32 %s23, %s32
      %s43 = sor.u32 %s41, %s42
      %p44 = scmp.eq.s32.totalorder %s43, 0
      %s46 = sadd.s32 %s45, 1
      %s47 = scalar_select %p44, %s45, %s46
      %p50 = pneg %p44
      %p51 = scmp.eq.s32.totalorder %s14, 1
      %p52 = por %p50, %p51
      %p53 = scmp.ne.s32.totalorder %s45, %s48
      %p54 = scmp.eq.s32.totalorder %s14, 0
      %p55 = por %p53, %p54
      %p56 = scmp.ne.s32.totalorder %s45, %s48
      %p57 = scmp.eq.s32.totalorder %s19, 1
      %p58 = por %p56, %p57
      %p59 = scmp.ne.s32.totalorder %s48, %s49
      %p60 = scmp.eq.s32.totalorder %s19, 0
      %p61 = por %p59, %p60
      %p62 = scmp.ne.s32.totalorder %s48, %s49
      %p63 = scmp.eq.s32.totalorder %s20, 1
      %p64 = por %p62, %p63
      %p66 = scmp.ne.s32.totalorder %s49, %s65
      %p67 = scmp.eq.s32.totalorder %s20, 0
      %p68 = por %p66, %p67
      %s69 = ssub.s32 %s21, %s40
      %s70 = ssub.s32 %s23, %s32
      %s71 = sor.u32 %s69, %s70
      %p72 = scmp.eq.s32.totalorder %s71, 0
      %s74 = sadd.s32 %s73, 1
      %s75 = scalar_select %p72, %s73, %s74
      %p78 = pneg %p72
      %p79 = scmp.eq.s32.totalorder %s14, 1
      %p80 = por %p78, %p79
      %p81 = scmp.ne.s32.totalorder %s73, %s76
      %p82 = scmp.eq.s32.totalorder %s14, 0
      %p83 = por %p81, %p82
      %p84 = scmp.ne.s32.totalorder %s73, %s76
      %p85 = scmp.eq.s32.totalorder %s19, 1
      %p86 = por %p84, %p85
      %p87 = scmp.ne.s32.totalorder %s76, %s77
      %p88 = scmp.eq.s32.totalorder %s19, 0
      %p89 = por %p87, %p88
      %p90 = scmp.ne.s32.totalorder %s76, %s77
      %p91 = scmp.eq.s32.totalorder %s20, 1
      %p92 = por %p90, %p91
      %p94 = scmp.ne.s32.totalorder %s77, %s93
      %p95 = scmp.eq.s32.totalorder %s20, 0
      %p96 = por %p94, %p95
      %s97 = ssub.s32 %s23, %s32
      %s98 = ssub.s32 %s22, %s36
      %s99 = sor.u32 %s97, %s98
      %p100 = scmp.eq.s32.totalorder %s99, 0
      %s102 = sadd.s32 %s101, 1
      %s103 = scalar_select %p100, %s101, %s102
      %p106 = pneg %p100
      %p107 = scmp.eq.s32.totalorder %s14, 1
      %p108 = por %p106, %p107
      %p109 = scmp.ne.s32.totalorder %s101, %s104
      %p110 = scmp.eq.s32.totalorder %s14, 0
      %p111 = por %p109, %p110
      %p112 = scmp.ne.s32.totalorder %s101, %s104
      %p113 = scmp.eq.s32.totalorder %s19, 1
      %p114 = por %p112, %p113
      %p115 = scmp.ne.s32.totalorder %s104, %s105
      %p116 = scmp.eq.s32.totalorder %s19, 0
      %p117 = por %p115, %p116
      %p118 = scmp.ne.s32.totalorder %s104, %s105
      %p119 = scmp.eq.s32.totalorder %s20, 1
      %p120 = por %p118, %p119
      %p122 = scmp.ne.s32.totalorder %s105, %s121
      %p123 = scmp.eq.s32.totalorder %s20, 0
      %p124 = por %p122, %p123
      %s125 = ssub.s32 %s21, %s40
      %p126 = scmp.eq.s32.totalorder %s125, 0
      %s128 = sadd.s32 %s127, 1
      %s129 = scalar_select %p126, %s127, %s128
      %p132 = pneg %p126
      %p133 = scmp.eq.s32.totalorder %s14, 1
      %p134 = por %p132, %p133
      %p135 = scmp.ne.s32.totalorder %s127, %s130
      %p136 = scmp.eq.s32.totalorder %s14, 0
      %p137 = por %p135, %p136
      %p138 = scmp.ne.s32.totalorder %s127, %s130
      %p139 = scmp.eq.s32.totalorder %s19, 1
      %p140 = por %p138, %p139
      %p141 = scmp.ne.s32.totalorder %s130, %s131
      %p142 = scmp.eq.s32.totalorder %s19, 0
      %p143 = por %p141, %p142
      %p144 = scmp.ne.s32.totalorder %s130, %s131
      %p145 = scmp.eq.s32.totalorder %s20, 1
      %p146 = por %p144, %p145
      %p148 = scmp.ne.s32.totalorder %s131, %s147
      %p149 = scmp.eq.s32.totalorder %s20, 0
      %p150 = por %p148, %p149
      %s151 = ssub.s32 %s22, %s36
      %p152 = scmp.eq.s32.totalorder %s151, 0
      %s154 = sadd.s32 %s153, 1
      %s155 = scalar_select %p152, %s153, %s154
      %p158 = pneg %p152
      %p159 = scmp.eq.s32.totalorder %s14, 1
      %p160 = por %p158, %p159
      %p161 = scmp.ne.s32.totalorder %s153, %s156
      %p162 = scmp.eq.s32.totalorder %s14, 0
      %p163 = por %p161, %p162
      %p164 = scmp.ne.s32.totalorder %s153, %s156
      %p165 = scmp.eq.s32.totalorder %s19, 1
      %p166 = por %p164, %p165
      %p167 = scmp.ne.s32.totalorder %s156, %s157
      %p168 = scmp.eq.s32.totalorder %s19, 0
      %p169 = por %p167, %p168
      %p170 = scmp.ne.s32.totalorder %s156, %s157
      %p171 = scmp.eq.s32.totalorder %s20, 1
      %p172 = por %p170, %p171
      %p174 = scmp.ne.s32.totalorder %s157, %s173
      %p175 = scmp.eq.s32.totalorder %s20, 0
      %p176 = por %p174, %p175
      %s177 = ssub.s32 %s21, %s40
      %s178 = ssub.s32 %s22, %s36
      %s179 = sor.u32 %s177, %s178
      %p180 = scmp.eq.s32.totalorder %s179, 0
      %s182 = sadd.s32 %s181, 1
      %s183 = scalar_select %p180, %s181, %s182
      %p186 = pneg %p180
      %p187 = scmp.eq.s32.totalorder %s14, 1
      %p188 = por %p186, %p187
      %p189 = scmp.ne.s32.totalorder %s181, %s184
      %p190 = scmp.eq.s32.totalorder %s14, 0
      %p191 = por %p189, %p190
      %p192 = scmp.ne.s32.totalorder %s181, %s184
      %p193 = scmp.eq.s32.totalorder %s19, 1
      %p194 = por %p192, %p193
      %p195 = scmp.ne.s32.totalorder %s184, %s185
      %p196 = scmp.eq.s32.totalorder %s19, 0
      %p197 = por %p195, %p196
      %p198 = scmp.ne.s32.totalorder %s184, %s185
      %p199 = scmp.eq.s32.totalorder %s20, 1
      %p200 = por %p198, %p199
      %p202 = scmp.ne.s32.totalorder %s185, %s201
      %p203 = scmp.eq.s32.totalorder %s20, 0
      %p204 = por %p202, %p203
      %s205 = ssub.s32 %s21, %s40
      %s206 = ssub.s32 %s22, %s36
      %s207 = sor.u32 %s205, %s206
      %p208 = scmp.eq.s32.totalorder %s207, 0
      %s210 = sadd.s32 %s209, 1
      %s211 = scalar_select %p208, %s209, %s210
      %p214 = pneg %p208
      %p215 = scmp.eq.s32.totalorder %s14, 1
      %p216 = por %p214, %p215
      %p217 = scmp.ne.s32.totalorder %s209, %s212
      %p218 = scmp.eq.s32.totalorder %s14, 0
      %p219 = por %p217, %p218
      %p220 = scmp.ne.s32.totalorder %s209, %s212
      %p221 = scmp.eq.s32.totalorder %s19, 1
      %p222 = por %p220, %p221
      %p223 = scmp.ne.s32.totalorder %s212, %s213
      %p224 = scmp.eq.s32.totalorder %s19, 0
      %p225 = por %p223, %p224
      %p226 = scmp.ne.s32.totalorder %s212, %s213
      %p227 = scmp.eq.s32.totalorder %s20, 1
      %p228 = por %p226, %p227
      %p230 = scmp.ne.s32.totalorder %s213, %s229
      %p231 = scmp.eq.s32.totalorder %s20, 0
      %p232 = por %p230, %p231
      %s233 = ssub.s32 %s21, %s40
      %s234 = ssub.s32 %s22, %s36
      %s235 = sor.u32 %s233, %s234
      %p236 = scmp.eq.s32.totalorder %s235, 0
      %s238 = sadd.s32 %s237, 1
      %s239 = scalar_select %p236, %s237, %s238
      %p242 = pneg %p236
      %p243 = scmp.eq.s32.totalorder %s14, 1
      %p244 = por %p242, %p243
      %p245 = scmp.ne.s32.totalorder %s237, %s240
      %p246 = scmp.eq.s32.totalorder %s14, 0
      %p247 = por %p245, %p246
      %p248 = scmp.ne.s32.totalorder %s237, %s240
      %p249 = scmp.eq.s32.totalorder %s19, 1
      %p250 = por %p248, %p249
      %p251 = scmp.ne.s32.totalorder %s240, %s241
      %p252 = scmp.eq.s32.totalorder %s19, 0
      %p253 = por %p251, %p252
      %p254 = scmp.ne.s32.totalorder %s240, %s241
      %p255 = scmp.eq.s32.totalorder %s20, 1
      %p256 = por %p254, %p255
      %p258 = scmp.ne.s32.totalorder %s241, %s257
      %p259 = scmp.eq.s32.totalorder %s20, 0
      %p260 = por %p258, %p259
      %p261 = scmp.le.s32.totalorder 1, %s14
      %p262 = scmp.lt.s32.totalorder %s14, 3
      %p263 = pnand %p261, %p262
      %p264 = pneg %p263
      // Predicated region
      $region9: #{quantized_linear.2} parent=5 // pred_check
        _
      $region10: #{quantized_linear.2} parent=5 // pred_check_branch
        %266 = sbr.rel (%p263) target = $region12
      $region11: #{quantized_linear.2} parent=5 // pred_region
        %s267 = ssub.s32 %s14, 1
        // Predicated region
        $region13: #{quantized_linear.2} parent=11 // pred_check
          %p268 = pneg %p61
        $region14: #{quantized_linear.2} parent=11 // pred_check_branch
          %270 = sbr.rel (%p268) target = $region16
        $region15: #{quantized_linear.2} parent=11 // pred_region
          %s271 = smul.u32 2, %s24
          %s272 = smul.u32 3, %s26
          %p273 = scmp.lt.s32.totalorder %s271, 1
          %s274 = scalar_select %p273, %s271, 1
          %p275 = scmp.lt.s32.totalorder %s272, 2
          %s276 = scalar_select %p275, %s272, 2
          %s277 = smul.addr %s274, 3
          %s278 = sadd.s32 %s276, %s277
          %s279 = smul.addr %s278, 4
          %s280 = scalar_lea.vmem %s0, %s279
          %s281 = smul.u32 2, %s24
          %s282 = smul.u32 3, %s26
        $region16: #{quantized_linear.2} parent=11 // pred_fallthru
          _
        // Predicated region
        $region17: #{quantized_linear.2} parent=11 // pred_check
          %p283 = pneg %p89
        $region18: #{quantized_linear.2} parent=11 // pred_check_branch
          %285 = sbr.rel (%p283) target = $region20
        $region19: #{quantized_linear.2} parent=11 // pred_region
          %s286 = smul.u32 2, %s24
          %s287 = smul.u32 3, %s26
          %p288 = scmp.lt.s32.totalorder %s286, 1
          %s289 = scalar_select %p288, %s286, 1
          %p290 = scmp.lt.s32.totalorder %s287, 2
          %s291 = scalar_select %p290, %s287, 2
          %s292 = smul.addr %s289, 3
          %s293 = sadd.s32 %s291, %s292
          %s294 = smul.addr %s293, 4
          %s295 = scalar_lea.vmem %s1, %s294
          %s296 = smul.u32 2, %s24
          %s297 = smul.u32 3, %s26
        $region20: #{quantized_linear.2} parent=11 // pred_fallthru
          _
        // Predicated region
        $region21: #{quantized_linear.2} parent=11 // pred_check
          %p298 = pneg %p143
        $region22: #{quantized_linear.2} parent=11 // pred_check_branch
          %300 = sbr.rel (%p298) target = $region24
        $region23: #{quantized_linear.2} parent=11 // pred_region
          %s301 = smul.u32 2, %s24
          %p302 = scmp.lt.s32.totalorder %s301, 1
          %s303 = scalar_select %p302, %s301, 1
          %s304 = smul.addr %s303, 8
          %s305 = scalar_lea.vmem %s3, %s304
          %s306 = smul.u32 2, %s24
        $region24: #{quantized_linear.2} parent=11 // pred_fallthru
          _
      $region12: #{quantized_linear.2} parent=5 // pred_fallthru
        _
      %p307 = scmp.lt.s32.totalorder %s14, 2
      // Predicated region
      $region25: #{quantized_linear.2} parent=5 // pred_check
        %p308 = pneg %p307
      $region26: #{quantized_linear.2} parent=5 // pred_check_branch
        %310 = sbr.rel (%p308) target = $region28
      $region27: #{quantized_linear.2} parent=5 // pred_region
        // Predicated region
        $region29: #{quantized_linear.2} parent=27 // pred_check
          %p311 = pneg %p111
        $region30: #{quantized_linear.2} parent=27 // pred_check_branch
          %313 = sbr.rel (%p311) target = $region32
        $region31: #{quantized_linear.2} parent=27 // pred_region
          %s314 = sand.u32 %s101, 1
          %s315 = sand.u32 %s101, 1
          %s316 = smul.addr %s315, 192
          %s317 = scalar_lea.vmem [#allocation2], %s316
          %s318 = smul.u32 48, %s23
          %s319 = smul.addr %s318, 2
          %s320 = sadd.s32 %s22, %s319
          %s321 = smul.addr %s320, 4
          %s322 = scalar_lea.vmem %s2, %s321
          // Predicated region
          $region33: #{quantized_linear.2} parent=31 // pred_check
            _
          $region34: #{quantized_linear.2} parent=31 // pred_check_branch
            %324 = sbr.rel (0) target = $region36
          $region35: #{quantized_linear.2} parent=31 // pred_region
            // Predicated region
            $region37: #{quantized_linear.2} parent=35 // pred_check
              _
            $region38: #{quantized_linear.2} parent=35 // pred_check_branch
              %326 = sbr.rel target = $region40
            $region39: #{quantized_linear.2} parent=35 // pred_region
              // Predicated region
              $region52: #{quantized_linear.2} parent=39 // pred_check
                _
              $region53: #{quantized_linear.2} parent=39 // pred_check_branch
                %436 = sbr.rel (0) target = $region55
              $region54: #{quantized_linear.2} parent=39 // pred_region
                loop: start=0, step=1, limit=1
                $region56: #{quantized_linear.2} parent=54 // loop_pre_header
                  _
                $region57: #{quantized_linear.2} parent=54 // loop_header
                  %s438 = sphi 0, %s442
                  %p439 = scmp.ge.s32.totalorder %s438, 1
                  %s443 = sphi %s322, %s322
                  %s444 = sphi %s317, %s317
                $region58: #{quantized_linear.2} parent=54 // loop_header_branch
                  %441 = sbr.rel (%p439) target = $region62
                $region59: #{quantized_linear.2} parent=54 // loop_body
                  _
                $region60: #{quantized_linear.2} parent=54 // loop_footer
                  %s442 = sadd.s32 1, %s438
                $region61: #{quantized_linear.2} parent=54 // loop_footer_branch
                  %437 = sbr.rel target = $region57
                $region62: #{quantized_linear.2} parent=54 // loop_exit
                  _
                %s446 = ssub.s32 16, 1
                loop: start=0, step=1, limit=1
                $region63: #{quantized_linear.2} parent=54 // loop_pre_header
                  _
                $region64: #{quantized_linear.2} parent=54 // loop_header
                  %s448 = sphi 0, %s452
                  %p449 = scmp.ge.s32.totalorder %s448, 1
                  %s453 = sphi %s322, %s322
                  %s454 = sphi %s317, %s317
                $region65: #{quantized_linear.2} parent=54 // loop_header_branch
                  %451 = sbr.rel (%p449) target = $region69
                $region66: #{quantized_linear.2} parent=54 // loop_body
                  %v455 = vld [vmem:[%s453] sm:%s446]
                  %456 = vst [vmem:[%s454] sm:%s446] %v455
                  %v457 = vld [vmem:[%s453 + $0x8] sm:%s446]
                  %458 = vst [vmem:[%s454 + $0x4] sm:%s446] %v457
                  %v459 = vld [vmem:[%s453 + $0x10] sm:%s446]
                  %460 = vst [vmem:[%s454 + $0x8] sm:%s446] %v459
                  %v461 = vld [vmem:[%s453 + $0x18] sm:%s446]
                  %462 = vst [vmem:[%s454 + $0xc] sm:%s446] %v461
                  %v463 = vld [vmem:[%s453 + $0x20] sm:%s446]
                  %464 = vst [vmem:[%s454 + $0x10] sm:%s446] %v463
                  %v465 = vld [vmem:[%s453 + $0x28] sm:%s446]
                  %466 = vst [vmem:[%s454 + $0x14] sm:%s446] %v465
                  %v467 = vld [vmem:[%s453 + $0x30] sm:%s446]
                  %468 = vst [vmem:[%s454 + $0x18] sm:%s446] %v467
                  %v469 = vld [vmem:[%s453 + $0x38] sm:%s446]
                  %470 = vst [vmem:[%s454 + $0x1c] sm:%s446] %v469
                  %v471 = vld [vmem:[%s453 + $0x40] sm:%s446]
                  %472 = vst [vmem:[%s454 + $0x20] sm:%s446] %v471
                  %v473 = vld [vmem:[%s453 + $0x48] sm:%s446]
                  %474 = vst [vmem:[%s454 + $0x24] sm:%s446] %v473
                  %v475 = vld [vmem:[%s453 + $0x50] sm:%s446]
                  %476 = vst [vmem:[%s454 + $0x28] sm:%s446] %v475
                  %v477 = vld [vmem:[%s453 + $0x58] sm:%s446]
                  %478 = vst [vmem:[%s454 + $0x2c] sm:%s446] %v477
                  %v479 = vld [vmem:[%s453 + $0x60] sm:%s446]
                  %480 = vst [vmem:[%s454 + $0x30] sm:%s446] %v479
                  %v481 = vld [vmem:[%s453 + $0x68] sm:%s446]
                  %482 = vst [vmem:[%s454 + $0x34] sm:%s446] %v481
                  %v483 = vld [vmem:[%s453 + $0x70] sm:%s446]
                  %484 = vst [vmem:[%s454 + $0x38] sm:%s446] %v483
                  %v485 = vld [vmem:[%s453 + $0x78] sm:%s446]
                  %486 = vst [vmem:[%s454 + $0x3c] sm:%s446] %v485
                  %v487 = vld [vmem:[%s453 + $0x80] sm:%s446]
                  %488 = vst [vmem:[%s454 + $0x40] sm:%s446] %v487
                  %v489 = vld [vmem:[%s453 + $0x88] sm:%s446]
                  %490 = vst [vmem:[%s454 + $0x44] sm:%s446] %v489
                  %v491 = vld [vmem:[%s453 + $0x90] sm:%s446]
                  %492 = vst [vmem:[%s454 + $0x48] sm:%s446] %v491
                  %v493 = vld [vmem:[%s453 + $0x98] sm:%s446]
                  %494 = vst [vmem:[%s454 + $0x4c] sm:%s446] %v493
                  %v495 = vld [vmem:[%s453 + $0xa0] sm:%s446]
                  %496 = vst [vmem:[%s454 + $0x50] sm:%s446] %v495
                  %v497 = vld [vmem:[%s453 + $0xa8] sm:%s446]
                  %498 = vst [vmem:[%s454 + $0x54] sm:%s446] %v497
                  %v499 = vld [vmem:[%s453 + $0xb0] sm:%s446]
                  %500 = vst [vmem:[%s454 + $0x58] sm:%s446] %v499
                  %v501 = vld [vmem:[%s453 + $0xb8] sm:%s446]
                  %502 = vst [vmem:[%s454 + $0x5c] sm:%s446] %v501
                  %v503 = vld [vmem:[%s453 + $0xc0] sm:%s446]
                  %504 = vst [vmem:[%s454 + $0x60] sm:%s446] %v503
                  %v505 = vld [vmem:[%s453 + $0xc8] sm:%s446]
                  %506 = vst [vmem:[%s454 + $0x64] sm:%s446] %v505
                  %v507 = vld [vmem:[%s453 + $0xd0] sm:%s446]
                  %508 = vst [vmem:[%s454 + $0x68] sm:%s446] %v507
                  %v509 = vld [vmem:[%s453 + $0xd8] sm:%s446]
                  %510 = vst [vmem:[%s454 + $0x6c] sm:%s446] %v509
                  %v511 = vld [vmem:[%s453 + $0xe0] sm:%s446]
                  %512 = vst [vmem:[%s454 + $0x70] sm:%s446] %v511
                  %v513 = vld [vmem:[%s453 + $0xe8] sm:%s446]
                  %514 = vst [vmem:[%s454 + $0x74] sm:%s446] %v513
                  %v515 = vld [vmem:[%s453 + $0xf0] sm:%s446]
                  %516 = vst [vmem:[%s454 + $0x78] sm:%s446] %v515
                  %v517 = vld [vmem:[%s453 + $0xf8] sm:%s446]
                  %518 = vst [vmem:[%s454 + $0x7c] sm:%s446] %v517
                  %v519 = vld [vmem:[%s453 + $0x100] sm:%s446]
                  %520 = vst [vmem:[%s454 + $0x80] sm:%s446] %v519
                  %v521 = vld [vmem:[%s453 + $0x108] sm:%s446]
                  %522 = vst [vmem:[%s454 + $0x84] sm:%s446] %v521
                  %v523 = vld [vmem:[%s453 + $0x110] sm:%s446]
                  %524 = vst [vmem:[%s454 + $0x88] sm:%s446] %v523
                  %v525 = vld [vmem:[%s453 + $0x118] sm:%s446]
                  %526 = vst [vmem:[%s454 + $0x8c] sm:%s446] %v525
                  %v527 = vld [vmem:[%s453 + $0x120] sm:%s446]
                  %528 = vst [vmem:[%s454 + $0x90] sm:%s446] %v527
                  %v529 = vld [vmem:[%s453 + $0x128] sm:%s446]
                  %530 = vst [vmem:[%s454 + $0x94] sm:%s446] %v529
                  %v531 = vld [vmem:[%s453 + $0x130] sm:%s446]
                  %532 = vst [vmem:[%s454 + $0x98] sm:%s446] %v531
                  %v533 = vld [vmem:[%s453 + $0x138] sm:%s446]
                  %534 = vst [vmem:[%s454 + $0x9c] sm:%s446] %v533
                  %v535 = vld [vmem:[%s453 + $0x140] sm:%s446]
                  %536 = vst [vmem:[%s454 + $0xa0] sm:%s446] %v535
                  %v537 = vld [vmem:[%s453 + $0x148] sm:%s446]
                  %538 = vst [vmem:[%s454 + $0xa4] sm:%s446] %v537
                  %v539 = vld [vmem:[%s453 + $0x150] sm:%s446]
                  %540 = vst [vmem:[%s454 + $0xa8] sm:%s446] %v539
                  %v541 = vld [vmem:[%s453 + $0x158] sm:%s446]
                  %542 = vst [vmem:[%s454 + $0xac] sm:%s446] %v541
                  %v543 = vld [vmem:[%s453 + $0x160] sm:%s446]
                  %544 = vst [vmem:[%s454 + $0xb0] sm:%s446] %v543
                  %v545 = vld [vmem:[%s453 + $0x168] sm:%s446]
                  %546 = vst [vmem:[%s454 + $0xb4] sm:%s446] %v545
                  %v547 = vld [vmem:[%s453 + $0x170] sm:%s446]
                  %548 = vst [vmem:[%s454 + $0xb8] sm:%s446] %v547
                  %v549 = vld [vmem:[%s453 + $0x178] sm:%s446]
                  %550 = vst [vmem:[%s454 + $0xbc] sm:%s446] %v549
                $region67: #{quantized_linear.2} parent=54 // loop_footer
                  %s452 = sadd.s32 1, %s448
                $region68: #{quantized_linear.2} parent=54 // loop_footer_branch
                  %447 = sbr.rel target = $region64
                $region69: #{quantized_linear.2} parent=54 // loop_exit
                  _
              $region55: #{quantized_linear.2} parent=39 // pred_fallthru
                _
            $region40: #{quantized_linear.2} parent=35 // pred_fallthru
              _
            // Predicated region
            $region41: #{quantized_linear.2} parent=35 // pred_check
              _
            $region42: #{quantized_linear.2} parent=35 // pred_check_branch
              %328 = sbr.rel (0) target = $region44
            $region43: #{quantized_linear.2} parent=35 // pred_region
              %s330 = ssub.s32 16, 1
              loop: start=0, step=1, limit=1
              $region45: #{quantized_linear.2} parent=43 // loop_pre_header
                _
              $region46: #{quantized_linear.2} parent=43 // loop_header
                %s332 = sphi 0, %s336
                %p333 = scmp.ge.s32.totalorder %s332, 1
                %s337 = sphi %s322, %s322
                %s338 = sphi %s317, %s317
              $region47: #{quantized_linear.2} parent=43 // loop_header_branch
                %335 = sbr.rel (%p333) target = $region51
              $region48: #{quantized_linear.2} parent=43 // loop_body
                %v339 = vld [vmem:[%s337] sm:%s330]
                %340 = vst [vmem:[%s338] sm:%s330] %v339
                %v341 = vld [vmem:[%s337 + $0x8] sm:%s330]
                %342 = vst [vmem:[%s338 + $0x4] sm:%s330] %v341
                %v343 = vld [vmem:[%s337 + $0x10] sm:%s330]
                %344 = vst [vmem:[%s338 + $0x8] sm:%s330] %v343
                %v345 = vld [vmem:[%s337 + $0x18] sm:%s330]
                %346 = vst [vmem:[%s338 + $0xc] sm:%s330] %v345
                %v347 = vld [vmem:[%s337 + $0x20] sm:%s330]
                %348 = vst [vmem:[%s338 + $0x10] sm:%s330] %v347
                %v349 = vld [vmem:[%s337 + $0x28] sm:%s330]
                %350 = vst [vmem:[%s338 + $0x14] sm:%s330] %v349
                %v351 = vld [vmem:[%s337 + $0x30] sm:%s330]
                %352 = vst [vmem:[%s338 + $0x18] sm:%s330] %v351
                %v353 = vld [vmem:[%s337 + $0x38] sm:%s330]
                %354 = vst [vmem:[%s338 + $0x1c] sm:%s330] %v353
                %v355 = vld [vmem:[%s337 + $0x40] sm:%s330]
                %356 = vst [vmem:[%s338 + $0x20] sm:%s330] %v355
                %v357 = vld [vmem:[%s337 + $0x48] sm:%s330]
                %358 = vst [vmem:[%s338 + $0x24] sm:%s330] %v357
                %v359 = vld [vmem:[%s337 + $0x50] sm:%s330]
                %360 = vst [vmem:[%s338 + $0x28] sm:%s330] %v359
                %v361 = vld [vmem:[%s337 + $0x58] sm:%s330]
                %362 = vst [vmem:[%s338 + $0x2c] sm:%s330] %v361
                %v363 = vld [vmem:[%s337 + $0x60] sm:%s330]
                %364 = vst [vmem:[%s338 + $0x30] sm:%s330] %v363
                %v365 = vld [vmem:[%s337 + $0x68] sm:%s330]
                %366 = vst [vmem:[%s338 + $0x34] sm:%s330] %v365
                %v367 = vld [vmem:[%s337 + $0x70] sm:%s330]
                %368 = vst [vmem:[%s338 + $0x38] sm:%s330] %v367
                %v369 = vld [vmem:[%s337 + $0x78] sm:%s330]
                %370 = vst [vmem:[%s338 + $0x3c] sm:%s330] %v369
                %v371 = vld [vmem:[%s337 + $0x80] sm:%s330]
                %372 = vst [vmem:[%s338 + $0x40] sm:%s330] %v371
                %v373 = vld [vmem:[%s337 + $0x88] sm:%s330]
                %374 = vst [vmem:[%s338 + $0x44] sm:%s330] %v373
                %v375 = vld [vmem:[%s337 + $0x90] sm:%s330]
                %376 = vst [vmem:[%s338 + $0x48] sm:%s330] %v375
                %v377 = vld [vmem:[%s337 + $0x98] sm:%s330]
                %378 = vst [vmem:[%s338 + $0x4c] sm:%s330] %v377
                %v379 = vld [vmem:[%s337 + $0xa0] sm:%s330]
                %380 = vst [vmem:[%s338 + $0x50] sm:%s330] %v379
                %v381 = vld [vmem:[%s337 + $0xa8] sm:%s330]
                %382 = vst [vmem:[%s338 + $0x54] sm:%s330] %v381
                %v383 = vld [vmem:[%s337 + $0xb0] sm:%s330]
                %384 = vst [vmem:[%s338 + $0x58] sm:%s330] %v383
                %v385 = vld [vmem:[%s337 + $0xb8] sm:%s330]
                %386 = vst [vmem:[%s338 + $0x5c] sm:%s330] %v385
                %v387 = vld [vmem:[%s337 + $0xc0] sm:%s330]
                %388 = vst [vmem:[%s338 + $0x60] sm:%s330] %v387
                %v389 = vld [vmem:[%s337 + $0xc8] sm:%s330]
                %390 = vst [vmem:[%s338 + $0x64] sm:%s330] %v389
                %v391 = vld [vmem:[%s337 + $0xd0] sm:%s330]
                %392 = vst [vmem:[%s338 + $0x68] sm:%s330] %v391
                %v393 = vld [vmem:[%s337 + $0xd8] sm:%s330]
                %394 = vst [vmem:[%s338 + $0x6c] sm:%s330] %v393
                %v395 = vld [vmem:[%s337 + $0xe0] sm:%s330]
                %396 = vst [vmem:[%s338 + $0x70] sm:%s330] %v395
                %v397 = vld [vmem:[%s337 + $0xe8] sm:%s330]
                %398 = vst [vmem:[%s338 + $0x74] sm:%s330] %v397
                %v399 = vld [vmem:[%s337 + $0xf0] sm:%s330]
                %400 = vst [vmem:[%s338 + $0x78] sm:%s330] %v399
                %v401 = vld [vmem:[%s337 + $0xf8] sm:%s330]
                %402 = vst [vmem:[%s338 + $0x7c] sm:%s330] %v401
                %v403 = vld [vmem:[%s337 + $0x100] sm:%s330]
                %404 = vst [vmem:[%s338 + $0x80] sm:%s330] %v403
                %v405 = vld [vmem:[%s337 + $0x108] sm:%s330]
                %406 = vst [vmem:[%s338 + $0x84] sm:%s330] %v405
                %v407 = vld [vmem:[%s337 + $0x110] sm:%s330]
                %408 = vst [vmem:[%s338 + $0x88] sm:%s330] %v407
                %v409 = vld [vmem:[%s337 + $0x118] sm:%s330]
                %410 = vst [vmem:[%s338 + $0x8c] sm:%s330] %v409
                %v411 = vld [vmem:[%s337 + $0x120] sm:%s330]
                %412 = vst [vmem:[%s338 + $0x90] sm:%s330] %v411
                %v413 = vld [vmem:[%s337 + $0x128] sm:%s330]
                %414 = vst [vmem:[%s338 + $0x94] sm:%s330] %v413
                %v415 = vld [vmem:[%s337 + $0x130] sm:%s330]
                %416 = vst [vmem:[%s338 + $0x98] sm:%s330] %v415
                %v417 = vld [vmem:[%s337 + $0x138] sm:%s330]
                %418 = vst [vmem:[%s338 + $0x9c] sm:%s330] %v417
                %v419 = vld [vmem:[%s337 + $0x140] sm:%s330]
                %420 = vst [vmem:[%s338 + $0xa0] sm:%s330] %v419
                %v421 = vld [vmem:[%s337 + $0x148] sm:%s330]
                %422 = vst [vmem:[%s338 + $0xa4] sm:%s330] %v421
                %v423 = vld [vmem:[%s337 + $0x150] sm:%s330]
                %424 = vst [vmem:[%s338 + $0xa8] sm:%s330] %v423
                %v425 = vld [vmem:[%s337 + $0x158] sm:%s330]
                %426 = vst [vmem:[%s338 + $0xac] sm:%s330] %v425
                %v427 = vld [vmem:[%s337 + $0x160] sm:%s330]
                %428 = vst [vmem:[%s338 + $0xb0] sm:%s330] %v427
                %v429 = vld [vmem:[%s337 + $0x168] sm:%s330]
                %430 = vst [vmem:[%s338 + $0xb4] sm:%s330] %v429
                %v431 = vld [vmem:[%s337 + $0x170] sm:%s330]
                %432 = vst [vmem:[%s338 + $0xb8] sm:%s330] %v431
                %v433 = vld [vmem:[%s337 + $0x178] sm:%s330]
                %434 = vst [vmem:[%s338 + $0xbc] sm:%s330] %v433
              $region49: #{quantized_linear.2} parent=43 // loop_footer
                %s336 = sadd.s32 1, %s332
              $region50: #{quantized_linear.2} parent=43 // loop_footer_branch
                %331 = sbr.rel target = $region46
              $region51: #{quantized_linear.2} parent=43 // loop_exit
                _
            $region44: #{quantized_linear.2} parent=35 // pred_fallthru
              _
          $region36: #{quantized_linear.2} parent=31 // pred_fallthru
            _
          %551 = vnop
        $region32: #{quantized_linear.2} parent=27 // pred_fallthru
          _
        // Predicated region
        $region70: #{quantized_linear.2} parent=27 // pred_check
          %p552 = pneg %p163
        $region71: #{quantized_linear.2} parent=27 // pred_check_branch
          %554 = sbr.rel (%p552) target = $region73
        $region72: #{quantized_linear.2} parent=27 // pred_region
          %p555 = scmp.lt.s32.totalorder %s22, 1
          %s556 = scalar_select %p555, %s22, 1
          %s557 = scalar_lea.vmem %s4, %s556
        $region73: #{quantized_linear.2} parent=27 // pred_fallthru
          _
      $region28: #{quantized_linear.2} parent=5 // pred_fallthru
        _
      %p558 = scmp.le.s32.totalorder 1, %s14
      %p559 = scmp.lt.s32.totalorder %s14, 3
      %p560 = pnand %p558, %p559
      %p561 = pneg %p560
      // Predicated region
      $region74: #{quantized_linear.2} parent=5 // pred_check
        _
      $region75: #{quantized_linear.2} parent=5 // pred_check_branch
        %563 = sbr.rel (%p560) target = $region77
      $region76: #{quantized_linear.2} parent=5 // pred_region
        %s564 = ssub.s32 %s14, 1
        %s565 = sand.u32 %s104, 1
        %s566 = sand.u32 %s104, 1
        %s567 = smul.addr %s566, 192
        %s568 = scalar_lea.vmem [#allocation2], %s567
        // Predicated region
        $region78: #{quantized_linear.2} parent=76 // pred_check
          %p569 = pneg %p117
        $region79: #{quantized_linear.2} parent=76 // pred_check_branch
          %571 = sbr.rel (%p569) target = $region81
        $region80: #{quantized_linear.2} parent=76 // pred_region
          _
        $region81: #{quantized_linear.2} parent=76 // pred_fallthru
          _
        %s572 = smul.u32 2, %s24
        %s573 = smul.u32 3, %s26
        %p574 = scmp.lt.s32.totalorder %s572, 1
        %s575 = scalar_select %p574, %s572, 1
        %p576 = scmp.lt.s32.totalorder %s573, 2
        %s577 = scalar_select %p576, %s573, 2
        %s578 = smul.addr %s575, 3
        %s579 = sadd.s32 %s577, %s578
        %s580 = smul.addr %s579, 4
        %s581 = scalar_lea.vmem %s0, %s580
        %p582 = pneg %p61
        %p583 = pneg %p58
        %s584 = smul.u32 2, %s24
        %s585 = smul.u32 3, %s26
        %p586 = scmp.lt.s32.totalorder %s584, 1
        %s587 = scalar_select %p586, %s584, 1
        %p588 = scmp.lt.s32.totalorder %s585, 2
        %s589 = scalar_select %p588, %s585, 2
        %s590 = smul.addr %s587, 3
        %s591 = sadd.s32 %s589, %s590
        %s592 = smul.addr %s591, 4
        %s593 = scalar_lea.vmem %s1, %s592
        %p594 = pneg %p89
        %p595 = pneg %p86
        %s596 = sand.u32 %s104, 1
        %s597 = sand.u32 %s104, 1
        %s598 = smul.addr %s597, 192
        %s599 = scalar_lea.vmem [#allocation2], %s598
        %p600 = pneg %p117
        %p601 = pneg %p114
        %s602 = smul.u32 2, %s24
        %p603 = scmp.lt.s32.totalorder %s602, 1
        %s604 = scalar_select %p603, %s602, 1
        %s605 = smul.addr %s604, 8
        %s606 = scalar_lea.vmem %s3, %s605
        %p607 = pneg %p143
        %p608 = pneg %p140
        %p609 = scmp.lt.s32.totalorder %s25, 1
        %s610 = scalar_select %p609, %s25, 1
        %s611 = scalar_lea.vmem %s4, %s610
        %p612 = pneg %p169
        %p613 = pneg %p166
        %p614 = pneg %p197
        %p615 = pneg %p194
        %s616 = sand.u32 %s184, 1
        %s617 = sand.u32 %s184, 1
        %s618 = smul.addr %s617, 16
        %s619 = scalar_lea.vmem [#allocation3], %s618
        %p620 = pneg %p225
        %p621 = pneg %p222
        %p622 = scmp.lt.s32.totalorder %s24, 0
        %s623 = scalar_select %p622, %s24, 0
        %p624 = scmp.lt.s32.totalorder %s25, 1
        %s625 = scalar_select %p624, %s25, 1
        %s626 = smul.addr %s623, 2
        %s627 = sadd.s32 %s625, %s626
        %s628 = smul.addr %s627, 8
        %s629 = scalar_lea.vmem %s6, %s628
        %p630 = pneg %p253
        %p631 = pneg %p250
        %p632 = scmp.lt.s32.totalorder %s24, 0
        %s633 = scalar_select %p632, %s24, 0
        %p634 = scmp.lt.s32.totalorder %s25, 1
        %s635 = scalar_select %p634, %s25, 1
        %s636 = smul.addr %s633, 2
        %s637 = sadd.s32 %s635, %s636
        %s638 = smul.addr %s637, 8
        %s639 = scalar_lea.vmem %s7, %s638
        %s640 = smul.u32 2, %s24
        %s641 = smul.u32 3, %s26
        %p642 = scmp.lt.s32.totalorder %s640, 1
        %s643 = scalar_select %p642, %s640, 1
        %p644 = scmp.lt.s32.totalorder %s641, 2
        %s645 = scalar_select %p644, %s641, 2
        %s646 = smul.addr %s643, 3
        %s647 = sadd.s32 %s645, %s646
        %s648 = smul.addr %s647, 4
        %s649 = scalar_lea.vmem %s0, %s648
        %s650 = smul.u32 2, %s24
        %s651 = smul.u32 3, %s26
        %s652 = smul.u32 2, %s24
        %s653 = smul.u32 3, %s26
        %p654 = scmp.lt.s32.totalorder %s652, 1
        %s655 = scalar_select %p654, %s652, 1
        %p656 = scmp.lt.s32.totalorder %s653, 2
        %s657 = scalar_select %p656, %s653, 2
        %s658 = smul.addr %s655, 3
        %s659 = sadd.s32 %s657, %s658
        %s660 = smul.addr %s659, 4
        %s661 = scalar_lea.vmem %s1, %s660
        %s662 = smul.u32 2, %s24
        %s663 = smul.u32 3, %s26
        %s664 = smul.u32 48, %s26
        %s665 = smul.u32 2, %s24
        %p666 = scmp.lt.s32.totalorder %s665, 1
        %s667 = scalar_select %p666, %s665, 1
        %s668 = smul.addr %s667, 8
        %s669 = scalar_lea.vmem %s3, %s668
        %s670 = smul.u32 2, %s24
        %p671 = scmp.lt.s32.totalorder %s25, 1
        %s672 = scalar_select %p671, %s25, 1
        %s673 = scalar_lea.vmem %s4, %s672
        %s674 = smul.u32 2, %s24
        %p675 = scmp.lt.s32.totalorder %s24, 0
        %s676 = scalar_select %p675, %s24, 0
        %p677 = scmp.lt.s32.totalorder %s25, 1
        %s678 = scalar_select %p677, %s25, 1
        %s679 = smul.addr %s676, 2
        %s680 = sadd.s32 %s678, %s679
        %s681 = smul.addr %s680, 8
        %s682 = scalar_lea.vmem %s6, %s681
        %p683 = scmp.lt.s32.totalorder %s24, 0
        %s684 = scalar_select %p683, %s24, 0
        %p685 = scmp.lt.s32.totalorder %s25, 1
        %s686 = scalar_select %p685, %s25, 1
        %s687 = smul.addr %s684, 2
        %s688 = sadd.s32 %s686, %s687
        %s689 = smul.addr %s688, 8
        %s690 = scalar_lea.vmem %s7, %s689
        %p691 = scmp.eq.s32.totalorder %s26, 0
        // Predicated region
        $region82: #{quantized_linear.2} parent=76 // pred_check
          %p692 = pneg %p691
        $region83: #{quantized_linear.2} parent=76 // pred_check_branch
          %694 = sbr.rel (%p692) target = $region85
        $region84: #{quantized_linear.2} parent=76 // pred_region
          %695 = vst [vmem:[%s619] sm:$0xff] 0.0
          %696 = vst [vmem:[%s619 + $0x8] sm:$0xff] 0.0
        $region85: #{quantized_linear.2} parent=76 // pred_fallthru
          _
        %v697 = vld [vmem:[%s619] sm:$0xff]
        %v698 = vld [vmem:[%s619 + $0x8] sm:$0xff]
        %v699 = vld [vmem:[%s649] sm:$0xff]
        %v700 = vld [vmem:[%s649 + $0x8] sm:$0xf]
        %v701 = vld [vmem:[%s649 + $0xc] sm:$0xff]
        %v702 = vld [vmem:[%s649 + $0x14] sm:$0xf]
        %v703 = vld [vmem:[%s568] sm:$0xf]
        %v704 = vld [vmem:[%s568 + $0x4] sm:$0xf]
        %v705 = vld [vmem:[%s568 + $0x8] sm:$0xf]
        %v706 = vld [vmem:[%s568 + $0xc] sm:$0xf]
        %v707 = vld [vmem:[%s568 + $0x10] sm:$0xf]
        %v708 = vld [vmem:[%s568 + $0x14] sm:$0xf]
        %v709 = vld [vmem:[%s568 + $0x18] sm:$0xf]
        %v710 = vld [vmem:[%s568 + $0x1c] sm:$0xf]
        %v711 = vld [vmem:[%s568 + $0x20] sm:$0xf]
        %v712 = vld [vmem:[%s568 + $0x24] sm:$0xf]
        %v713 = vld [vmem:[%s568 + $0x28] sm:$0xf]
        %v714 = vld [vmem:[%s568 + $0x2c] sm:$0xf]
        %v715 = vld [vmem:[%s568 + $0x30] sm:$0xf]
        %v716 = vld [vmem:[%s568 + $0x34] sm:$0xf]
        %v717 = vld [vmem:[%s568 + $0x38] sm:$0xf]
        %v718 = vld [vmem:[%s568 + $0x3c] sm:$0xf]
        %v719 = vld [vmem:[%s568 + $0x40] sm:$0xf]
        %v720 = vld [vmem:[%s568 + $0x44] sm:$0xf]
        %v721 = vld [vmem:[%s568 + $0x48] sm:$0xf]
        %v722 = vld [vmem:[%s568 + $0x4c] sm:$0xf]
        %v723 = vld [vmem:[%s568 + $0x50] sm:$0xf]
        %v724 = vld [vmem:[%s568 + $0x54] sm:$0xf]
        %v725 = vld [vmem:[%s568 + $0x58] sm:$0xf]
        %v726 = vld [vmem:[%s568 + $0x5c] sm:$0xf]
        %v727 = vld [vmem:[%s568 + $0x60] sm:$0xf]
        %v728 = vld [vmem:[%s568 + $0x64] sm:$0xf]
        %v729 = vld [vmem:[%s568 + $0x68] sm:$0xf]
        %v730 = vld [vmem:[%s568 + $0x6c] sm:$0xf]
        %v731 = vld [vmem:[%s568 + $0x70] sm:$0xf]
        %v732 = vld [vmem:[%s568 + $0x74] sm:$0xf]
        %v733 = vld [vmem:[%s568 + $0x78] sm:$0xf]
        %v734 = vld [vmem:[%s568 + $0x7c] sm:$0xf]
        %v735 = vld [vmem:[%s568 + $0x80] sm:$0xf]
        %v736 = vld [vmem:[%s568 + $0x84] sm:$0xf]
        %v737 = vld [vmem:[%s568 + $0x88] sm:$0xf]
        %v738 = vld [vmem:[%s568 + $0x8c] sm:$0xf]
        %v739 = vld [vmem:[%s568 + $0x90] sm:$0xf]
        %v740 = vld [vmem:[%s568 + $0x94] sm:$0xf]
        %v741 = vld [vmem:[%s568 + $0x98] sm:$0xf]
        %v742 = vld [vmem:[%s568 + $0x9c] sm:$0xf]
        %v743 = vld [vmem:[%s568 + $0xa0] sm:$0xf]
        %v744 = vld [vmem:[%s568 + $0xa4] sm:$0xf]
        %v745 = vld [vmem:[%s568 + $0xa8] sm:$0xf]
        %v746 = vld [vmem:[%s568 + $0xac] sm:$0xf]
        %v747 = vld [vmem:[%s568 + $0xb0] sm:$0xf]
        %v748 = vld [vmem:[%s568 + $0xb4] sm:$0xf]
        %v749 = vld [vmem:[%s568 + $0xb8] sm:$0xf]
        %v750 = vld [vmem:[%s568 + $0xbc] sm:$0xf]
        %v751 = vld [vmem:[%s661] sm:$0xff]
        %v752 = vld [vmem:[%s661 + $0x8] sm:$0xf]
        %v753 = vld [vmem:[%s661 + $0xc] sm:$0xff]
        %v754 = vld [vmem:[%s661 + $0x14] sm:$0xf]
        %v759 = vunpack.c.l.b16 %v751
        %v760 = vunpack.c.h.b16 %v751
        %v761 = vunpack.c.l.b16 %v752
        %v762 = vunpack.c.l.b16 %v753
        %v763 = vunpack.c.h.b16 %v753
        %v764 = vunpack.c.l.b16 %v754
        %v765 = vpack.c.b16 %v762, %v759
        %v766 = vpack.c.b16 %v763, %v760
        %v767 = vpack.c.b16 %v764, %v761
        %v819 = vunpack.c.l.b16 %v703
        %v820 = vunpack.c.l.b16 %v704
        %v821 = vunpack.c.l.b16 %v705
        %v822 = vunpack.c.l.b16 %v706
        %v823 = vunpack.c.l.b16 %v707
        %v824 = vunpack.c.l.b16 %v708
        %v825 = vunpack.c.l.b16 %v709
        %v826 = vunpack.c.l.b16 %v710
        %v827 = vunpack.c.l.b16 %v711
        %v828 = vunpack.c.l.b16 %v712
        %v829 = vunpack.c.l.b16 %v713
        %v830 = vunpack.c.l.b16 %v714
        %v831 = vunpack.c.l.b16 %v715
        %v832 = vunpack.c.l.b16 %v716
        %v833 = vunpack.c.l.b16 %v717
        %v834 = vunpack.c.l.b16 %v718
        %v835 = vunpack.c.l.b16 %v719
        %v836 = vunpack.c.l.b16 %v720
        %v837 = vunpack.c.l.b16 %v721
        %v838 = vunpack.c.l.b16 %v722
        %v839 = vunpack.c.l.b16 %v723
        %v840 = vunpack.c.l.b16 %v724
        %v841 = vunpack.c.l.b16 %v725
        %v842 = vunpack.c.l.b16 %v726
        %v843 = vunpack.c.l.b16 %v727
        %v844 = vunpack.c.l.b16 %v728
        %v845 = vunpack.c.l.b16 %v729
        %v846 = vunpack.c.l.b16 %v730
        %v847 = vunpack.c.l.b16 %v731
        %v848 = vunpack.c.l.b16 %v732
        %v849 = vunpack.c.l.b16 %v733
        %v850 = vunpack.c.l.b16 %v734
        %v851 = vunpack.c.l.b16 %v735
        %v852 = vunpack.c.l.b16 %v736
        %v853 = vunpack.c.l.b16 %v737
        %v854 = vunpack.c.l.b16 %v738
        %v855 = vunpack.c.l.b16 %v739
        %v856 = vunpack.c.l.b16 %v740
        %v857 = vunpack.c.l.b16 %v741
        %v858 = vunpack.c.l.b16 %v742
        %v859 = vunpack.c.l.b16 %v743
        %v860 = vunpack.c.l.b16 %v744
        %v861 = vunpack.c.l.b16 %v745
        %v862 = vunpack.c.l.b16 %v746
        %v863 = vunpack.c.l.b16 %v747
        %v864 = vunpack.c.l.b16 %v748
        %v865 = vunpack.c.l.b16 %v749
        %v866 = vunpack.c.l.b16 %v750
        %v867 = vpack.c.b16 %v820, %v819
        %v868 = vpack.c.b16 %v822, %v821
        %v869 = vpack.c.b16 %v824, %v823
        %v870 = vpack.c.b16 %v826, %v825
        %v871 = vpack.c.b16 %v828, %v827
        %v872 = vpack.c.b16 %v830, %v829
        %v873 = vpack.c.b16 %v832, %v831
        %v874 = vpack.c.b16 %v834, %v833
        %v875 = vpack.c.b16 %v836, %v835
        %v876 = vpack.c.b16 %v838, %v837
        %v877 = vpack.c.b16 %v840, %v839
        %v878 = vpack.c.b16 %v842, %v841
        %v879 = vpack.c.b16 %v844, %v843
        %v880 = vpack.c.b16 %v846, %v845
        %v881 = vpack.c.b16 %v848, %v847
        %v882 = vpack.c.b16 %v850, %v849
        %v883 = vpack.c.b16 %v852, %v851
        %v884 = vpack.c.b16 %v854, %v853
        %v885 = vpack.c.b16 %v856, %v855
        %v886 = vpack.c.b16 %v858, %v857
        %v887 = vpack.c.b16 %v860, %v859
        %v888 = vpack.c.b16 %v862, %v861
        %v889 = vpack.c.b16 %v864, %v863
        %v890 = vpack.c.b16 %v866, %v865
        %915 = vmatpush.bf16.msra.mxu0 %v874
        %916 = vmatpush.bf16.msra.mxu0 %v873
        %917 = vmatpush.bf16.msra.mxu0 %v872
        %918 = vmatpush.bf16.msra.mxu0 %v871
        %919 = vmatpush.bf16.msra.mxu0 %v870
        %920 = vmatpush.bf16.msra.mxu0 %v869
        %921 = vmatpush.bf16.msra.mxu0 %v868
        %922 = vmatpush.bf16.msra.mxu0 %v867
        %923 = vmatmul.bf16.gmra.mxu0 %v765
        %v924 = vpop.f32.mrf.mxu0
        %v925 = vadd.f32 0.0, %v924
        %v926 = vpop.f32.mrf.mxu0
        %v927 = vadd.f32 0.0, %v926
        %928 = vdwg.mxu0
        %929 = vmatpush.bf16.msra.mxu0 %v882
        %930 = vmatpush.bf16.msra.mxu0 %v881
        %931 = vmatpush.bf16.msra.mxu0 %v880
        %932 = vmatpush.bf16.msra.mxu0 %v879
        %933 = vmatpush.bf16.msra.mxu0 %v878
        %934 = vmatpush.bf16.msra.mxu0 %v877
        %935 = vmatpush.bf16.msra.mxu0 %v876
        %936 = vmatpush.bf16.msra.mxu0 %v875
        %937 = vmatmul.bf16.gmra.mxu0 %v766
        %v938 = vpop.f32.mrf.mxu0
        %v939 = vadd.f32 %v925, %v938
        %v940 = vpop.f32.mrf.mxu0
        %v941 = vadd.f32 %v927, %v940
        %942 = vdwg.mxu0
        %943 = vmatpush.bf16.msra.mxu0 %v890
        %944 = vmatpush.bf16.msra.mxu0 %v889
        %945 = vmatpush.bf16.msra.mxu0 %v888
        %946 = vmatpush.bf16.msra.mxu0 %v887
        %947 = vmatpush.bf16.msra.mxu0 %v886
        %948 = vmatpush.bf16.msra.mxu0 %v885
        %949 = vmatpush.bf16.msra.mxu0 %v884
        %950 = vmatpush.bf16.msra.mxu0 %v883
        %951 = vmatmul.bf16.gmra.mxu0 %v767
        %v952 = vpop.f32.mrf.mxu0
        %v953 = vadd.f32 %v939, %v952
        %v954 = vpop.f32.mrf.mxu0
        %v955 = vadd.f32 %v941, %v954
        %956 = vdwg.mxu0
        %v961 = vunpack.c.l.b16 %v699
        %v962 = vunpack.c.h.b16 %v699
        %v963 = vunpack.c.l.b16 %v700
        %v964 = vunpack.c.l.b16 %v701
        %v965 = vunpack.c.h.b16 %v701
        %v966 = vunpack.c.l.b16 %v702
        %v967 = vpack.c.b16 %v964, %v961
        %v968 = vpack.c.b16 %v965, %v962
        %v969 = vpack.c.b16 %v966, %v963
        %973 = vmatpush.bf16.msra.mxu0 %v874
        %974 = vmatpush.bf16.msra.mxu0 %v873
        %975 = vmatpush.bf16.msra.mxu0 %v872
        %976 = vmatpush.bf16.msra.mxu0 %v871
        %977 = vmatpush.bf16.msra.mxu0 %v870
        %978 = vmatpush.bf16.msra.mxu0 %v869
        %979 = vmatpush.bf16.msra.mxu0 %v868
        %980 = vmatpush.bf16.msra.mxu0 %v867
        %981 = vmatmul.bf16.gmra.mxu0 %v967
        %v982 = vpop.f32.mrf.mxu0
        %v983 = vadd.f32 %v953, %v982
        %v984 = vpop.f32.mrf.mxu0
        %v985 = vadd.f32 %v955, %v984
        %986 = vdwg.mxu0
        %987 = vmatpush.bf16.msra.mxu0 %v882
        %988 = vmatpush.bf16.msra.mxu0 %v881
        %989 = vmatpush.bf16.msra.mxu0 %v880
        %990 = vmatpush.bf16.msra.mxu0 %v879
        %991 = vmatpush.bf16.msra.mxu0 %v878
        %992 = vmatpush.bf16.msra.mxu0 %v877
        %993 = vmatpush.bf16.msra.mxu0 %v876
        %994 = vmatpush.bf16.msra.mxu0 %v875
        %995 = vmatmul.bf16.gmra.mxu0 %v968
        %v996 = vpop.f32.mrf.mxu0
        %v997 = vadd.f32 %v983, %v996
        %v998 = vpop.f32.mrf.mxu0
        %v999 = vadd.f32 %v985, %v998
        %1000 = vdwg.mxu0
        %1001 = vmatpush.bf16.msra.mxu0 %v890
        %1002 = vmatpush.bf16.msra.mxu0 %v889
        %1003 = vmatpush.bf16.msra.mxu0 %v888
        %1004 = vmatpush.bf16.msra.mxu0 %v887
        %1005 = vmatpush.bf16.msra.mxu0 %v886
        %1006 = vmatpush.bf16.msra.mxu0 %v885
        %1007 = vmatpush.bf16.msra.mxu0 %v884
        %1008 = vmatpush.bf16.msra.mxu0 %v883
        %1009 = vmatmul.bf16.gmra.mxu0 %v969
        %v1010 = vpop.f32.mrf.mxu0
        %v1011 = vadd.f32 %v997, %v1010
        %v1012 = vpop.f32.mrf.mxu0
        %v1013 = vadd.f32 %v999, %v1012
        %1014 = vdwg.mxu0
        %v1015 = vadd.f32 %v697, %v1011
        %v1016 = vadd.f32 %v698, %v1013
        %1017 = vst [vmem:[%s619] sm:$0xff] %v1015
        %1018 = vst [vmem:[%s619 + $0x8] sm:$0xff] %v1016
        // Predicated region
        $region86: #{quantized_linear.2} parent=76 // pred_check
          %p1019 = pneg %p691
        $region87: #{quantized_linear.2} parent=76 // pred_check_branch
          %1021 = sbr.rel (%p1019) target = $region89
        $region88: #{quantized_linear.2} parent=76 // pred_region
          %v1022 = vld [vmem:[%s619] sm:$0xff]
          %v1023 = vld [vmem:[%s619 + $0x8] sm:$0xff]
          %v1024 = vld [vmem:[%s669] sm:$0xff]
          %v1025 = vld [vmem:[%s669 + $0x8] sm:$0xff]
          %1027 = vset.pattern.permute.xlu0 0
          %1028 = vperm.xlu0 %1027, %v1024
          %v1029 = vpop.permute.xlu0 %1028
          %1032 = vset.pattern.permute.xlu0 0
          %1033 = vperm.xlu0 %1032, %v1025
          %v1034 = vpop.permute.xlu0 %1033
          %v1036 = vadd.f32 %v1022, %v1029
          %v1037 = vadd.f32 %v1023, %v1034
          %v1038 = vld [vmem:[%s673] sm:$0x1]
          %v1040 = vperm.slane %v1038, 0
          %v1042 = vadd.f32 %v1036, %v1040
          %v1043 = vadd.f32 %v1037, %v1040
          %1044 = vst [vmem:[%s619] sm:$0xff] %v1042
          %1045 = vst [vmem:[%s619 + $0x8] sm:$0xff] %v1043
          %p1046 = scmp.eq.s32.totalorder %s24, 0
          %p1047 = scmp.eq.s32.totalorder %s25, 1
          %p1048 = por %p1046, %p1047
          // Predicated region
          $region90: #{quantized_linear.2} parent=88 // pred_check
            %p1049 = pneg %p1048
          $region91: #{quantized_linear.2} parent=88 // pred_check_branch
            %1051 = sbr.rel (%p1049) target = $region93
          $region92: #{quantized_linear.2} parent=88 // pred_region
            %v1052 = vlaneseq
            %v1053 = vshrl.u32 %v1052, 7
            %v1054 = vadd.s32 %v1053, 8
            %s1055 = smul.u32 %s24, 16
            %v1056 = vstv %s1055
            %v1057 = vadd.s32 %v1053, %v1056
            %v1058 = vadd.s32 %v1054, %v1056
            %v1059 = vlaneseq
            %v1060 = vand.u32 %v1059, 127
            %s1061 = smul.u32 %s25, 128
            %v1062 = vstv %s1061
            %v1063 = vadd.s32 %v1060, %v1062
            %vm1064 = vcmp.lt.s32.totalorder %v1057, 12
            %vm1065 = vcmp.lt.s32.totalorder %v1058, 12
            %vm1066 = vcmp.lt.s32.totalorder %v1063, 160
            %vm1067 = vmand %vm1064, %vm1066
            %vm1068 = vmand %vm1065, %vm1066
            %v1069 = vsel %vm1067, %v1042, inf
            %v1070 = vsel %vm1068, %v1043, inf
            %v1071 = vsel %vm1067, %v1042, -inf
            %v1072 = vsel %vm1068, %v1043, -inf
            %1073 = vmin.xlane.f32.xlu0 %v1069
            %v1074 = vpop.xlane.xlu0 %1073
            %1075 = vmin.xlane.f32.xlu0 %v1070
            %v1076 = vpop.xlane.xlu0 %1075
            %v1077 = vmin.f32 %v1074, %v1076
            %v1078 = vrot.slane %v1077, 4
            %v1079 = vmin.f32 %v1077, %v1078
            %v1080 = vrot.slane %v1079, 2
            %v1081 = vmin.f32 %v1079, %v1080
            %v1082 = vrot.slane %v1081, 1
            %v1083 = vmin.f32 %v1081, %v1082
            %1084 = vmax.xlane.f32.xlu0 %v1071
            %v1085 = vpop.xlane.xlu0 %1084
            %1086 = vmax.xlane.f32.xlu0 %v1072
            %v1087 = vpop.xlane.xlu0 %1086
            %v1088 = vmax.f32 %v1085, %v1087
            %v1089 = vrot.slane %v1088, 4
            %v1090 = vmax.f32 %v1088, %v1089
            %v1091 = vrot.slane %v1090, 2
            %v1092 = vmax.f32 %v1090, %v1091
            %v1093 = vrot.slane %v1092, 1
            %v1094 = vmax.f32 %v1092, %v1093
            %1095 = vst [vmem:[%s682] sm:$0xff] %v1083
            %1096 = vst [vmem:[%s690] sm:$0xff] %v1094
          $region93: #{quantized_linear.2} parent=88 // pred_fallthru
            _
          %p1097 = pneg %p1048
          // Predicated region
          $region94: #{quantized_linear.2} parent=88 // pred_check
            _
          $region95: #{quantized_linear.2} parent=88 // pred_check_branch
            %1099 = sbr.rel (%p1048) target = $region97
          $region96: #{quantized_linear.2} parent=88 // pred_region
            %1100 = vmin.xlane.f32.xlu0 %v1042
            %v1101 = vpop.xlane.xlu0 %1100
            %1102 = vmin.xlane.f32.xlu0 %v1043
            %v1103 = vpop.xlane.xlu0 %1102
            %v1104 = vmin.f32 %v1101, %v1103
            %v1105 = vrot.slane %v1104, 4
            %v1106 = vmin.f32 %v1104, %v1105
            %v1107 = vrot.slane %v1106, 2
            %v1108 = vmin.f32 %v1106, %v1107
            %v1109 = vrot.slane %v1108, 1
            %v1110 = vmin.f32 %v1108, %v1109
            %1111 = vmax.xlane.f32.xlu0 %v1042
            %v1112 = vpop.xlane.xlu0 %1111
            %1113 = vmax.xlane.f32.xlu0 %v1043
            %v1114 = vpop.xlane.xlu0 %1113
            %v1115 = vmax.f32 %v1112, %v1114
            %v1116 = vrot.slane %v1115, 4
            %v1117 = vmax.f32 %v1115, %v1116
            %v1118 = vrot.slane %v1117, 2
            %v1119 = vmax.f32 %v1117, %v1118
            %v1120 = vrot.slane %v1119, 1
            %v1121 = vmax.f32 %v1119, %v1120
            %1122 = vst [vmem:[%s682] sm:$0xff] %v1110
            %1123 = vst [vmem:[%s690] sm:$0xff] %v1121
          $region97: #{quantized_linear.2} parent=88 // pred_fallthru
            _
        $region89: #{quantized_linear.2} parent=76 // pred_fallthru
          _
        %s1124 = sand.u32 %s184, 1
        %s1125 = sand.u32 %s184, 1
        %s1126 = smul.addr %s1125, 16
        %s1127 = scalar_lea.vmem [#allocation3], %s1126
        %p1128 = scmp.lt.s32.totalorder %s24, 0
        %s1129 = scalar_select %p1128, %s24, 0
        %p1130 = scmp.lt.s32.totalorder %s25, 1
        %s1131 = scalar_select %p1130, %s25, 1
        %s1132 = smul.addr %s1129, 2
        %s1133 = sadd.s32 %s1131, %s1132
        %s1134 = smul.addr %s1133, 8
        %s1135 = scalar_lea.vmem %s6, %s1134
        %p1136 = scmp.lt.s32.totalorder %s24, 0
        %s1137 = scalar_select %p1136, %s24, 0
        %p1138 = scmp.lt.s32.totalorder %s25, 1
        %s1139 = scalar_select %p1138, %s25, 1
        %s1140 = smul.addr %s1137, 2
        %s1141 = sadd.s32 %s1139, %s1140
        %s1142 = smul.addr %s1141, 8
        %s1143 = scalar_lea.vmem %s7, %s1142
        // Predicated region
        $region98: #{quantized_linear.2} parent=76 // pred_check
          %p1144 = pneg %p194
        $region99: #{quantized_linear.2} parent=76 // pred_check_branch
          %1146 = sbr.rel (%p1144) target = $region101
        $region100: #{quantized_linear.2} parent=76 // pred_region
          %s1147 = smul.u32 2, %s24
          %s1148 = smul.addr %s1147, 2
          %s1149 = sadd.s32 %s25, %s1148
          %s1150 = smul.addr %s1149, 8
          %s1151 = scalar_lea.vmem %s5, %s1150
          // Predicated region
          $region102: #{quantized_linear.2} parent=100 // pred_check
            _
          $region103: #{quantized_linear.2} parent=100 // pred_check_branch
            %1153 = sbr.rel (0) target = $region105
          $region104: #{quantized_linear.2} parent=100 // pred_region
            // Predicated region
            $region106: #{quantized_linear.2} parent=104 // pred_check
              _
            $region107: #{quantized_linear.2} parent=104 // pred_check_branch
              %1155 = sbr.rel (0) target = $region109
            $region108: #{quantized_linear.2} parent=104 // pred_region
              // Predicated region
              $region121: #{quantized_linear.2} parent=108 // pred_check
                _
              $region122: #{quantized_linear.2} parent=108 // pred_check_branch
                %1173 = sbr.rel (0) target = $region124
              $region123: #{quantized_linear.2} parent=108 // pred_region
                loop: start=0, step=1, limit=1
                $region125: #{quantized_linear.2} parent=123 // loop_pre_header
                  _
                $region126: #{quantized_linear.2} parent=123 // loop_header
                  %s1175 = sphi 0, %s1179
                  %p1176 = scmp.ge.s32.totalorder %s1175, 1
                  %s1180 = sphi %s1127, %s1127
                  %s1181 = sphi %s1151, %s1151
                $region127: #{quantized_linear.2} parent=123 // loop_header_branch
                  %1178 = sbr.rel (%p1176) target = $region131
                $region128: #{quantized_linear.2} parent=123 // loop_body
                  %v1182 = vld [vmem:[%s1180] sm:$0xff]
                  %1183 = vst [vmem:[%s1181] sm:$0xff] %v1182
                  %v1184 = vld [vmem:[%s1180 + $0x8] sm:$0xff]
                  %1185 = vst [vmem:[%s1181 + $0x10] sm:$0xff] %v1184
                $region129: #{quantized_linear.2} parent=123 // loop_footer
                  %s1179 = sadd.s32 1, %s1175
                $region130: #{quantized_linear.2} parent=123 // loop_footer_branch
                  %1174 = sbr.rel target = $region126
                $region131: #{quantized_linear.2} parent=123 // loop_exit
                  _
              $region124: #{quantized_linear.2} parent=108 // pred_fallthru
                _
              // Predicated region
              $region132: #{quantized_linear.2} parent=108 // pred_check
                _
              $region133: #{quantized_linear.2} parent=108 // pred_check_branch
                %1187 = sbr.rel target = $region135
              $region134: #{quantized_linear.2} parent=108 // pred_region
                _
              $region135: #{quantized_linear.2} parent=108 // pred_fallthru
                _
            $region109: #{quantized_linear.2} parent=104 // pred_fallthru
              _
            // Predicated region
            $region110: #{quantized_linear.2} parent=104 // pred_check
              _
            $region111: #{quantized_linear.2} parent=104 // pred_check_branch
              %1157 = sbr.rel target = $region113
            $region112: #{quantized_linear.2} parent=104 // pred_region
              %s1159 = ssub.s32 256, 1
              loop: start=0, step=1, limit=1
              $region114: #{quantized_linear.2} parent=112 // loop_pre_header
                _
              $region115: #{quantized_linear.2} parent=112 // loop_header
                %s1161 = sphi 0, %s1165
                %p1162 = scmp.ge.s32.totalorder %s1161, 1
                %s1166 = sphi %s1127, %s1127
                %s1167 = sphi %s1151, %s1151
              $region116: #{quantized_linear.2} parent=112 // loop_header_branch
                %1164 = sbr.rel (%p1162) target = $region120
              $region117: #{quantized_linear.2} parent=112 // loop_body
                %v1168 = vld [vmem:[%s1166] sm:%s1159]
                %1169 = vst [vmem:[%s1167] sm:%s1159] %v1168
                %v1170 = vld [vmem:[%s1166 + $0x8] sm:%s1159]
                %1171 = vst [vmem:[%s1167 + $0x10] sm:%s1159] %v1170
              $region118: #{quantized_linear.2} parent=112 // loop_footer
                %s1165 = sadd.s32 1, %s1161
              $region119: #{quantized_linear.2} parent=112 // loop_footer_branch
                %1160 = sbr.rel target = $region115
              $region120: #{quantized_linear.2} parent=112 // loop_exit
                _
            $region113: #{quantized_linear.2} parent=104 // pred_fallthru
              _
          $region105: #{quantized_linear.2} parent=100 // pred_fallthru
            _
          %1188 = vnop
        $region101: #{quantized_linear.2} parent=76 // pred_fallthru
          _
        // Predicated region
        $region136: #{quantized_linear.2} parent=76 // pred_check
          %p1189 = pneg %p222
        $region137: #{quantized_linear.2} parent=76 // pred_check_branch
          %1191 = sbr.rel (%p1189) target = $region139
        $region138: #{quantized_linear.2} parent=76 // pred_region
          _
        $region139: #{quantized_linear.2} parent=76 // pred_fallthru
          _
        // Predicated region
        $region140: #{quantized_linear.2} parent=76 // pred_check
          %p1192 = pneg %p250
        $region141: #{quantized_linear.2} parent=76 // pred_check_branch
          %1194 = sbr.rel (%p1192) target = $region143
        $region142: #{quantized_linear.2} parent=76 // pred_region
          _
        $region143: #{quantized_linear.2} parent=76 // pred_fallthru
          _
      $region77: #{quantized_linear.2} parent=5 // pred_fallthru
        _
      %p1195 = scmp.le.s32.totalorder 2, %s14
      // Predicated region
      $region144: #{quantized_linear.2} parent=5 // pred_check
        %p1196 = pneg %p1195
      $region145: #{quantized_linear.2} parent=5 // pred_check_branch
        %1198 = sbr.rel (%p1196) target = $region147
      $region146: #{quantized_linear.2} parent=5 // pred_region
        %s1199 = ssub.s32 %s14, 2
        // Predicated region
        $region148: #{quantized_linear.2} parent=146 // pred_check
          %p1200 = pneg %p200
        $region149: #{quantized_linear.2} parent=146 // pred_check_branch
          %1202 = sbr.rel (%p1200) target = $region151
        $region150: #{quantized_linear.2} parent=146 // pred_region
          %s1203 = sand.u32 %s185, 1
          %s1204 = sand.u32 %s185, 1
          %s1205 = smul.addr %s1204, 16
          %s1206 = scalar_lea.vmem [#allocation3], %s1205
        $region151: #{quantized_linear.2} parent=146 // pred_fallthru
          _
        // Predicated region
        $region152: #{quantized_linear.2} parent=146 // pred_check
          %p1207 = pneg %p228
        $region153: #{quantized_linear.2} parent=146 // pred_check_branch
          %1209 = sbr.rel (%p1207) target = $region155
        $region154: #{quantized_linear.2} parent=146 // pred_region
          %p1210 = scmp.lt.s32.totalorder %s27, 0
          %s1211 = scalar_select %p1210, %s27, 0
          %p1212 = scmp.lt.s32.totalorder %s28, 1
          %s1213 = scalar_select %p1212, %s28, 1
          %s1214 = smul.addr %s1211, 2
          %s1215 = sadd.s32 %s1213, %s1214
          %s1216 = smul.addr %s1215, 8
          %s1217 = scalar_lea.vmem %s6, %s1216
        $region155: #{quantized_linear.2} parent=146 // pred_fallthru
          _
        // Predicated region
        $region156: #{quantized_linear.2} parent=146 // pred_check
          %p1218 = pneg %p256
        $region157: #{quantized_linear.2} parent=146 // pred_check_branch
          %1220 = sbr.rel (%p1218) target = $region159
        $region158: #{quantized_linear.2} parent=146 // pred_region
          %p1221 = scmp.lt.s32.totalorder %s27, 0
          %s1222 = scalar_select %p1221, %s27, 0
          %p1223 = scmp.lt.s32.totalorder %s28, 1
          %s1224 = scalar_select %p1223, %s28, 1
          %s1225 = smul.addr %s1222, 2
          %s1226 = sadd.s32 %s1224, %s1225
          %s1227 = smul.addr %s1226, 8
          %s1228 = scalar_lea.vmem %s7, %s1227
        $region159: #{quantized_linear.2} parent=146 // pred_fallthru
          _
      $region147: #{quantized_linear.2} parent=5 // pred_fallthru
        _
    $region6: #{quantized_linear.2} parent=1 // loop_footer
      %s18 = sadd.s32 1, %s14
    $region7: #{quantized_linear.2} parent=1 // loop_footer_branch
      %13 = sbr.rel target = $region3
    $region8: #{quantized_linear.2} parent=1 // loop_exit
      _

</llo_original>
